<compile_context>
chip_gen: v6e
topology: v6e:2x2x1
jax: 0.10.0
libtpu: 0.0.40
codegen_flags: <defaults>
</compile_context>

<pallas_src>
import functools

import jax
import jax.numpy as jnp
from jax import lax
from jax.experimental import pallas as pl
from jax.experimental.pallas import tpu as pltpu

EPS = 1e-5  # torch.nn.GroupNorm default eps


def _decoder_block_kernel(*refs, H, W, groups, out_channels, upsample):
    if upsample:
        (x_ref,
         g1_ref, b1_ref, w1_ref, c1_ref,
         g2_ref, b2_ref, w2_ref, c2_ref,
         g3_ref, b3_ref, w3_ref, c3_ref,
         g4_ref, b4_ref, w4_ref, c4_ref,
         dup_ref, out_ref) = refs
    else:
        (x_ref,
         g1_ref, b1_ref, w1_ref, c1_ref,
         g2_ref, b2_ref, w2_ref, c2_ref,
         g3_ref, b3_ref, w3_ref, c3_ref,
         g4_ref, b4_ref, w4_ref, c4_ref,
         out_ref) = refs
        dup_ref = None

    HW = H * W
    x = x_ref[0]  # (Cin, HW) float32 — one batch sample, channels on sublanes

    # ---- hoisted spatial-validity masks for the 3x3 convs (built once, used by
    # both conv3x3 calls; (1, HW) broadcasts over channels for free).
    pos = lax.broadcasted_iota(jnp.int32, (1, HW), 1)   # flattened index p = h*W + w
    col = pos % W

    def tap_mask(dy, dx):
        m = jnp.ones((1, HW), jnp.float32)
        if dy == -1:
            m = m * (pos >= W)            # needs row h-1  -> invalid on top edge
        elif dy == 1:
            m = m * (pos < HW - W)        # needs row h+1  -> invalid on bottom edge
        if dx == -1:
            m = m * (col >= 1)            # needs col w-1  -> invalid on left edge
        elif dx == 1:
            m = m * (col <= W - 2)        # needs col w+1  -> invalid on right edge
        return m

    masks = [tap_mask(kh - 1, kw - 1) for kh in range(3) for kw in range(3)]

    def group_norm_relu(a, gamma, beta):
        # a: (C, HW); gamma/beta: (C, 1).  torch.nn.GroupNorm semantics:
        # per-sample, per-group mean/var over (channels-in-group x spatial),
        # biased variance, per-channel affine.  Two-pass (centered) variance.
        C = a.shape[0]
        if groups == 1:
            n = C * HW
            s = jnp.sum(a, axis=1, keepdims=True)              # (C, 1)
            mean = jnp.sum(s, axis=0, keepdims=True) / n       # (1, 1)
            d = a - mean
            ss = jnp.sum(d * d, axis=1, keepdims=True)         # (C, 1)
            var = jnp.sum(ss, axis=0, keepdims=True) / n       # (1, 1)
            inv = lax.rsqrt(var + EPS)
            out = d * inv * gamma + beta
        else:
            cg = C // groups
            n = cg * HW
            s = jnp.sum(a, axis=1, keepdims=True)                               # (C, 1)
            mean_g = jnp.sum(s.reshape(groups, cg), axis=1, keepdims=True) / n  # (G, 1)
            mean_c = jnp.broadcast_to(mean_g, (groups, cg)).reshape(C, 1)
            d = a - mean_c
            ss = jnp.sum(d * d, axis=1, keepdims=True)                          # (C, 1)
            var_g = jnp.sum(ss.reshape(groups, cg), axis=1, keepdims=True) / n
            inv_c = jnp.broadcast_to(lax.rsqrt(var_g + EPS), (groups, cg)).reshape(C, 1)
            out = d * inv_c * gamma + beta
        return jnp.maximum(out, 0.0)

    def conv3x3(a, w_im2col, bias):
        # a: (Cin, HW) f32; w_im2col: (Cout, 9*Cin) bf16 (pre-reshaped in the
        # wrapper, tap order (kh, kw, cin)); bias: (Cout, 1) f32.
        taps = []
        i = 0
        for kh in range(3):
            for kw in range(3):
                dy, dx = kh - 1, kw - 1
                d = dy * W + dx
                if d == 0:
                    taps.append(a)
                else:
                    # shifted[p] = a[p + d]; jnp.roll lowers to lane slices +
                    # concatenate (XLU); edge positions are zeroed by the mask.
                    taps.append(jnp.roll(a, -d, axis=1) * masks[i])
                i += 1
        slab = jnp.concatenate(taps, axis=0)                   # (9*Cin, HW)
        out = jnp.dot(w_im2col, slab.astype(jnp.bfloat16),
                      preferred_element_type=jnp.float32)      # (Cout, HW) f32
        return out + bias

    # x = relu(norm1(x))
    xa = group_norm_relu(x, g1_ref[...], b1_ref[...])                          # (Cin, HW)
    # h = relu(norm2(conv1(x)))        (1x1 conv = matmul, weights as LHS)
    h = jnp.dot(w1_ref[...], xa.astype(jnp.bfloat16),
                preferred_element_type=jnp.float32) + c1_ref[...]              # (hid, HW)
    h = group_norm_relu(h, g2_ref[...], b2_ref[...])
    # h = relu(norm3(conv2(h)))        (3x3 conv, pad 1, im2col)
    h = conv3x3(h, w2_ref[...], c2_ref[...])
    h = group_norm_relu(h, g3_ref[...], b3_ref[...])
    # h = relu(norm4(conv3(h)))        (3x3 conv, pad 1, im2col)
    h = conv3x3(h, w3_ref[...], c3_ref[...])
    h = group_norm_relu(h, g4_ref[...], b4_ref[...])
    # h = conv4(h)                     (1x1 conv = matmul)
    h = jnp.dot(w4_ref[...], h.astype(jnp.bfloat16),
                preferred_element_type=jnp.float32) + c4_ref[...]              # (out, HW)
    # residual against the post-norm1/relu activation (first out_channels rows)
    y = h + xa[:out_channels, :]

    if upsample:
        # Fused nearest-neighbour 2x upsample: exact f32 0/1 duplication matmul
        # (one source element per output column) -> lane-dense (out, 4*HW) store.
        out_ref[0] = jnp.dot(y, dup_ref[...], preferred_element_type=jnp.float32)
    else:
        out_ref[0] = y


def decoder_block_forward(x_nchw, params, *, groups=1, upsample=True):
    N, Cin, H, W = x_nchw.shape
    HW = H * W
    out_channels = params["w4"].shape[0]
    f32, bf16 = jnp.float32, jnp.bfloat16

    def colvec(v):                       # (C,) -> (C, 1) f32, broadcasts over lanes
        return v.astype(f32).reshape(-1, 1)

    def im2col_w(w):                     # OIHW (Cout, Cin, 3, 3) -> (Cout, 9*Cin) bf16
        cout, cin = w.shape[0], w.shape[1]
        return jnp.transpose(w, (0, 2, 3, 1)).reshape(cout, 9 * cin).astype(bf16)

    plist = [
        colvec(params["g1"]), colvec(params["bt1"]),
        params["w1"].astype(bf16), colvec(params["bc1"]),
        colvec(params["g2"]), colvec(params["bt2"]),
        im2col_w(params["w2"]), colvec(params["bc2"]),
        colvec(params["g3"]), colvec(params["bt3"]),
        im2col_w(params["w3"]), colvec(params["bc3"]),
        colvec(params["g4"]), colvec(params["bt4"]),
        params["w4"].astype(bf16), colvec(params["bc4"]),
    ]

    # NCHW -> (N, C, HW) is a pure reshape (no transpose) with the (C, HW) layout.
    x_flat = x_nchw.astype(f32).reshape(N, Cin, HW)

    args = [x_flat] + plist
    in_specs = [pl.BlockSpec((1, Cin, HW), lambda n: (n, 0, 0))]
    in_specs += [pl.BlockSpec(p.shape, lambda n: (0, 0)) for p in plist]

    if upsample:
        # 0/1 duplication matrix: out[c, (2h+r)*2W + 2w+s] = y[c, h*W + w]
        r2, c2 = jnp.arange(2 * H), jnp.arange(2 * W)
        src = (r2[:, None] // 2) * W + (c2[None, :] // 2)                # (2H, 2W)
        dup = (jnp.arange(HW)[:, None] == src.reshape(1, -1)).astype(f32)  # (HW, 4HW)
        args.append(dup)
        in_specs.append(pl.BlockSpec((HW, 4 * HW), lambda n: (0, 0)))
        out_hw = 4 * HW
    else:
        out_hw = HW

    kernel = functools.partial(_decoder_block_kernel, H=H, W=W, groups=groups,
                               out_channels=out_channels, upsample=upsample)

    y = pl.pallas_call(
        kernel,
        out_shape=jax.ShapeDtypeStruct((N, out_channels, out_hw), f32),
        grid=(N,),
        in_specs=in_specs,
        out_specs=pl.BlockSpec((1, out_channels, out_hw), lambda n: (n, 0, 0)),
        compiler_params=pltpu.CompilerParams(
            dimension_semantics=("parallel",),      # batch over megacore/dual TC
            vmem_limit_bytes=64 * 1024 * 1024),
    )(*args)

    # Output is already NCHW-flat; only a metadata reshape remains.
    if upsample:
        return y.reshape(N, out_channels, 2 * H, 2 * W)
    return y.reshape(N, out_channels, H, W)


def reference_forward(x, params, *, groups=1, upsample=True):
    """Pure-JAX NCHW reference mirroring the PyTorch module exactly (f32)."""
    out_channels = params["w4"].shape[0]

    def gn(t, gamma, beta):
        N, C, Hh, Ww = t.shape
        tg = t.reshape(N, groups, -1)
        mean = tg.mean(axis=2, keepdims=True)
        var = tg.var(axis=2, keepdims=True)            # biased, matches torch GN
        tn = ((tg - mean) / jnp.sqrt(var + EPS)).reshape(N, C, Hh, Ww)
        return tn * gamma.reshape(1, C, 1, 1) + beta.reshape(1, C, 1, 1)

    def conv1x1(t, w, b):                               # w: (Cout, Cin)
        return jnp.einsum("nchw,oc->nohw", t, w) + b.reshape(1, -1, 1, 1)

    def conv3x3(t, w, b):                               # w: OIHW (Cout, Cin, 3, 3)
        y = lax.conv_general_dilated(t, w, (1, 1), ((1, 1), (1, 1)),
                                     dimension_numbers=("NCHW", "OIHW", "NCHW"))
        return y + b.reshape(1, -1, 1, 1)

    relu = jax.nn.relu
    xa = relu(gn(x, params["g1"], params["bt1"]))
    h = relu(gn(conv1x1(xa, params["w1"], params["bc1"]), params["g2"], params["bt2"]))
    h = relu(gn(conv3x3(h, params["w2"], params["bc2"]), params["g3"], params["bt3"]))
    h = relu(gn(conv3x3(h, params["w3"], params["bc3"]), params["g4"], params["bt4"]))
    h = conv1x1(h, params["w4"], params["bc4"])
    y = h + xa[:, :out_channels]
    if upsample:
        y = jnp.repeat(jnp.repeat(y, 2, axis=2), 2, axis=3)
    return y


def init_params(key, in_channels, out_channels, channel_ratio=4):
    hidden = in_channels // channel_ratio
    ks = jax.random.split(key, 16)

    def nrm(k, shape, scale=1.0):
        return scale * jax.random.normal(k, shape, jnp.float32)

    return {
        # GroupNorm affine params (torch shapes: (C,))
        "g1": 1.0 + 0.1 * nrm(ks[0], (in_channels,)),
        "bt1": 0.1 * nrm(ks[1], (in_channels,)),
        "g2": 1.0 + 0.1 * nrm(ks[4], (hidden,)),
        "bt2": 0.1 * nrm(ks[5], (hidden,)),
        "g3": 1.0 + 0.1 * nrm(ks[8], (hidden,)),
        "bt3": 0.1 * nrm(ks[9], (hidden,)),
        "g4": 1.0 + 0.1 * nrm(ks[12], (hidden,)),
        "bt4": 0.1 * nrm(ks[13], (hidden,)),
        # conv1: 1x1 Cin->hidden, stored (Cout, Cin)
        "w1": nrm(ks[2], (hidden, in_channels), (1.0 / in_channels) ** 0.5),
        "bc1": 0.05 * nrm(ks[3], (hidden,)),
        # conv2/conv3: 3x3 hidden->hidden, stored OIHW (Cout, Cin, 3, 3)
        "w2": nrm(ks[6], (hidden, hidden, 3, 3), (1.0 / (9 * hidden)) ** 0.5),
        "bc2": 0.05 * nrm(ks[7], (hidden,)),
        "w3": nrm(ks[10], (hidden, hidden, 3, 3), (1.0 / (9 * hidden)) ** 0.5),
        "bc3": 0.05 * nrm(ks[11], (hidden,)),
        # conv4: 1x1 hidden->out, stored (Cout, Cin)
        "w4": nrm(ks[14], (out_channels, hidden), (1.0 / hidden) ** 0.5),
        "bc4": 0.05 * nrm(ks[15], (out_channels,)),
    }


if __name__ == "__main__":
    N, Cin, H, W = 2, 16, 16, 16
    out_channels = 8      # <= in_channels, as the module asserts
    channel_ratio = 4     # hidden = 4
    groups = 1            # module default

    key = jax.random.PRNGKey(0)
    kp, kx = jax.random.split(key)
    params = init_params(kp, Cin, out_channels, channel_ratio)
    x = jax.random.normal(kx, (N, Cin, H, W), jnp.float32)

    y = decoder_block_forward(x, params, groups=groups, upsample=True)
    y = jax.block_until_ready(y)
    assert y.shape == (N, out_channels, 2 * H, 2 * W), y.shape

    y_ref = reference_forward(x, params, groups=groups, upsample=True)
    max_err = float(jnp.max(jnp.abs(y - y_ref)))
    # Kernel uses bf16 MXU operands (f32 accumulation) per v6e/v7x guidance, so a
    # few-e-3 .. ~1e-2 numeric difference vs the f32 reference is expected.
    # Structural bugs (wrong shift/mask/layout/upsample) would give O(1) errors.
    assert max_err < 8e-2, f"max abs error vs reference: {max_err}"

    print("KERNEL_OK")
</pallas_src>

<mosaic_0001>
module attributes {stable_mosaic.version = 11 : i64} {
  func.func @_decoder_block_kernel(%arg0: i32, %arg1: memref<1x16x256xf32, #tpu.memory_space<vmem>>, %arg2: memref<16x1xf32, #tpu.memory_space<vmem>>, %arg3: memref<16x1xf32, #tpu.memory_space<vmem>>, %arg4: memref<4x16xbf16, #tpu.memory_space<vmem>>, %arg5: memref<4x1xf32, #tpu.memory_space<vmem>>, %arg6: memref<4x1xf32, #tpu.memory_space<vmem>>, %arg7: memref<4x1xf32, #tpu.memory_space<vmem>>, %arg8: memref<4x36xbf16, #tpu.memory_space<vmem>>, %arg9: memref<4x1xf32, #tpu.memory_space<vmem>>, %arg10: memref<4x1xf32, #tpu.memory_space<vmem>>, %arg11: memref<4x1xf32, #tpu.memory_space<vmem>>, %arg12: memref<4x36xbf16, #tpu.memory_space<vmem>>, %arg13: memref<4x1xf32, #tpu.memory_space<vmem>>, %arg14: memref<4x1xf32, #tpu.memory_space<vmem>>, %arg15: memref<4x1xf32, #tpu.memory_space<vmem>>, %arg16: memref<8x4xbf16, #tpu.memory_space<vmem>>, %arg17: memref<8x1xf32, #tpu.memory_space<vmem>>, %arg18: memref<256x1024xf32, #tpu.memory_space<vmem>>, %arg19: memref<1x8x1024xf32, #tpu.memory_space<vmem>>) attributes {dimension_semantics = [#tpu.dimension_semantics<parallel>], iteration_bounds = array<i64: 2>, scalar_prefetch = 0 : i64, scratch_operands = 0 : i64, tpu.core_type = #tpu.core_type<tc>, window_params = [{transform_indices = @transform_0, window_bounds = array<i64: 1, 16, 256>}, {pipeline_mode = #tpu.pipeline_mode<synchronous>, transform_indices = @transform_1, window_bounds = array<i64: 16, 1>}, {pipeline_mode = #tpu.pipeline_mode<synchronous>, transform_indices = @transform_2, window_bounds = array<i64: 16, 1>}, {pipeline_mode = #tpu.pipeline_mode<synchronous>, transform_indices = @transform_3, window_bounds = array<i64: 4, 16>}, {pipeline_mode = #tpu.pipeline_mode<synchronous>, transform_indices = @transform_4, window_bounds = array<i64: 4, 1>}, {pipeline_mode = #tpu.pipeline_mode<synchronous>, transform_indices = @transform_5, window_bounds = array<i64: 4, 1>}, {pipeline_mode = #tpu.pipeline_mode<synchronous>, transform_indices = @transform_6, window_bounds = array<i64: 4, 1>}, {pipeline_mode = #tpu.pipeline_mode<synchronous>, transform_indices = @transform_7, window_bounds = array<i64: 4, 36>}, {pipeline_mode = #tpu.pipeline_mode<synchronous>, transform_indices = @transform_8, window_bounds = array<i64: 4, 1>}, {pipeline_mode = #tpu.pipeline_mode<synchronous>, transform_indices = @transform_9, window_bounds = array<i64: 4, 1>}, {pipeline_mode = #tpu.pipeline_mode<synchronous>, transform_indices = @transform_10, window_bounds = array<i64: 4, 1>}, {pipeline_mode = #tpu.pipeline_mode<synchronous>, transform_indices = @transform_11, window_bounds = array<i64: 4, 36>}, {pipeline_mode = #tpu.pipeline_mode<synchronous>, transform_indices = @transform_12, window_bounds = array<i64: 4, 1>}, {pipeline_mode = #tpu.pipeline_mode<synchronous>, transform_indices = @transform_13, window_bounds = array<i64: 4, 1>}, {pipeline_mode = #tpu.pipeline_mode<synchronous>, transform_indices = @transform_14, window_bounds = array<i64: 4, 1>}, {pipeline_mode = #tpu.pipeline_mode<synchronous>, transform_indices = @transform_15, window_bounds = array<i64: 8, 4>}, {pipeline_mode = #tpu.pipeline_mode<synchronous>, transform_indices = @transform_16, window_bounds = array<i64: 8, 1>}, {pipeline_mode = #tpu.pipeline_mode<synchronous>, transform_indices = @transform_17, window_bounds = array<i64: 256, 1024>}, {transform_indices = @transform_18, window_bounds = array<i64: 1, 8, 1024>}]} {
    %c0 = arith.constant 0 : index
    %c0_0 = arith.constant 0 : index
    %c0_1 = arith.constant 0 : index
    %0 = vector.load %arg1[%c0, %c0_0, %c0_1] : memref<1x16x256xf32, #tpu.memory_space<vmem>>, vector<1x16x256xf32>
    %1 = vector.shape_cast %0 : vector<1x16x256xf32> to vector<16x256xf32>
    %2 = tpu.iota {dimensions = array<i32: 1>} : vector<1x256xi32>
    %c16_i32 = arith.constant 16 : i32
    %c0_i32 = arith.constant 0 : i32
    %3 = arith.cmpi eq, %c16_i32, %c0_i32 : i32
    %c1_i32 = arith.constant 1 : i32
    %4 = arith.select %3, %c1_i32, %c16_i32 : i32
    %5 = vector.broadcast %4 : i32 to vector<1x256xi32>
    %6 = arith.remsi %2, %5 : vector<1x256xi32>
    %c0_i32_2 = arith.constant 0 : i32
    %7 = vector.broadcast %c0_i32_2 : i32 to vector<1x256xi32>
    %8 = arith.cmpi ne, %6, %7 : vector<1x256xi32>
    %c0_i32_3 = arith.constant 0 : i32
    %9 = vector.broadcast %c0_i32_3 : i32 to vector<1x256xi32>
    %10 = arith.cmpi slt, %6, %9 : vector<1x256xi32>
    %c0_i32_4 = arith.constant 0 : i32
    %11 = arith.cmpi slt, %4, %c0_i32_4 : i32
    %12 = vector.broadcast %11 : i1 to vector<1x256xi1>
    %13 = vector.broadcast %12 : vector<1x256xi1> to vector<1x256xi1>
    %14 = arith.xori %10, %13 : vector<1x256xi1>
    %15 = arith.andi %14, %8 : vector<1x256xi1>
    %16 = vector.broadcast %4 : i32 to vector<1x256xi32>
    %17 = arith.addi %6, %16 : vector<1x256xi32>
    %18 = arith.select %15, %17, %6 : vector<1x256xi1>, vector<1x256xi32>
    %cst = arith.constant 1.000000e+00 : f32
    %19 = vector.broadcast %cst : f32 to vector<1x256xf32>
    %c16_i32_5 = arith.constant 16 : i32
    %20 = vector.broadcast %c16_i32_5 : i32 to vector<1x256xi32>
    %21 = arith.cmpi sge, %2, %20 : vector<1x256xi32>
    %22 = arith.extui %21 : vector<1x256xi1> to vector<1x256xi32>
    %23 = arith.sitofp %22 : vector<1x256xi32> to vector<1x256xf32>
    %24 = arith.mulf %19, %23 : vector<1x256xf32>
    %c1_i32_6 = arith.constant 1 : i32
    %25 = vector.broadcast %c1_i32_6 : i32 to vector<1x256xi32>
    %26 = arith.cmpi sge, %18, %25 : vector<1x256xi32>
    %27 = arith.extui %26 : vector<1x256xi1> to vector<1x256xi32>
    %28 = arith.sitofp %27 : vector<1x256xi32> to vector<1x256xf32>
    %29 = arith.mulf %24, %28 : vector<1x256xf32>
    %cst_7 = arith.constant 1.000000e+00 : f32
    %30 = vector.broadcast %cst_7 : f32 to vector<1x256xf32>
    %c16_i32_8 = arith.constant 16 : i32
    %31 = vector.broadcast %c16_i32_8 : i32 to vector<1x256xi32>
    %32 = arith.cmpi sge, %2, %31 : vector<1x256xi32>
    %33 = arith.extui %32 : vector<1x256xi1> to vector<1x256xi32>
    %34 = arith.sitofp %33 : vector<1x256xi32> to vector<1x256xf32>
    %35 = arith.mulf %30, %34 : vector<1x256xf32>
    %cst_9 = arith.constant 1.000000e+00 : f32
    %36 = vector.broadcast %cst_9 : f32 to vector<1x256xf32>
    %c16_i32_10 = arith.constant 16 : i32
    %37 = vector.broadcast %c16_i32_10 : i32 to vector<1x256xi32>
    %38 = arith.cmpi sge, %2, %37 : vector<1x256xi32>
    %39 = arith.extui %38 : vector<1x256xi1> to vector<1x256xi32>
    %40 = arith.sitofp %39 : vector<1x256xi32> to vector<1x256xf32>
    %41 = arith.mulf %36, %40 : vector<1x256xf32>
    %c14_i32 = arith.constant 14 : i32
    %42 = vector.broadcast %c14_i32 : i32 to vector<1x256xi32>
    %43 = arith.cmpi sle, %18, %42 : vector<1x256xi32>
    %44 = arith.extui %43 : vector<1x256xi1> to vector<1x256xi32>
    %45 = arith.sitofp %44 : vector<1x256xi32> to vector<1x256xf32>
    %46 = arith.mulf %41, %45 : vector<1x256xf32>
    %cst_11 = arith.constant 1.000000e+00 : f32
    %47 = vector.broadcast %cst_11 : f32 to vector<1x256xf32>
    %c1_i32_12 = arith.constant 1 : i32
    %48 = vector.broadcast %c1_i32_12 : i32 to vector<1x256xi32>
    %49 = arith.cmpi sge, %18, %48 : vector<1x256xi32>
    %50 = arith.extui %49 : vector<1x256xi1> to vector<1x256xi32>
    %51 = arith.sitofp %50 : vector<1x256xi32> to vector<1x256xf32>
    %52 = arith.mulf %47, %51 : vector<1x256xf32>
    %cst_13 = arith.constant 1.000000e+00 : f32
    %53 = vector.broadcast %cst_13 : f32 to vector<1x256xf32>
    %c14_i32_14 = arith.constant 14 : i32
    %54 = vector.broadcast %c14_i32_14 : i32 to vector<1x256xi32>
    %55 = arith.cmpi sle, %18, %54 : vector<1x256xi32>
    %56 = arith.extui %55 : vector<1x256xi1> to vector<1x256xi32>
    %57 = arith.sitofp %56 : vector<1x256xi32> to vector<1x256xf32>
    %58 = arith.mulf %53, %57 : vector<1x256xf32>
    %cst_15 = arith.constant 1.000000e+00 : f32
    %59 = vector.broadcast %cst_15 : f32 to vector<1x256xf32>
    %c240_i32 = arith.constant 240 : i32
    %60 = vector.broadcast %c240_i32 : i32 to vector<1x256xi32>
    %61 = arith.cmpi slt, %2, %60 : vector<1x256xi32>
    %62 = arith.extui %61 : vector<1x256xi1> to vector<1x256xi32>
    %63 = arith.sitofp %62 : vector<1x256xi32> to vector<1x256xf32>
    %64 = arith.mulf %59, %63 : vector<1x256xf32>
    %c1_i32_16 = arith.constant 1 : i32
    %65 = vector.broadcast %c1_i32_16 : i32 to vector<1x256xi32>
    %66 = arith.cmpi sge, %18, %65 : vector<1x256xi32>
    %67 = arith.extui %66 : vector<1x256xi1> to vector<1x256xi32>
    %68 = arith.sitofp %67 : vector<1x256xi32> to vector<1x256xf32>
    %69 = arith.mulf %64, %68 : vector<1x256xf32>
    %cst_17 = arith.constant 1.000000e+00 : f32
    %70 = vector.broadcast %cst_17 : f32 to vector<1x256xf32>
    %c240_i32_18 = arith.constant 240 : i32
    %71 = vector.broadcast %c240_i32_18 : i32 to vector<1x256xi32>
    %72 = arith.cmpi slt, %2, %71 : vector<1x256xi32>
    %73 = arith.extui %72 : vector<1x256xi1> to vector<1x256xi32>
    %74 = arith.sitofp %73 : vector<1x256xi32> to vector<1x256xf32>
    %75 = arith.mulf %70, %74 : vector<1x256xf32>
    %cst_19 = arith.constant 1.000000e+00 : f32
    %76 = vector.broadcast %cst_19 : f32 to vector<1x256xf32>
    %c240_i32_20 = arith.constant 240 : i32
    %77 = vector.broadcast %c240_i32_20 : i32 to vector<1x256xi32>
    %78 = arith.cmpi slt, %2, %77 : vector<1x256xi32>
    %79 = arith.extui %78 : vector<1x256xi1> to vector<1x256xi32>
    %80 = arith.sitofp %79 : vector<1x256xi32> to vector<1x256xf32>
    %81 = arith.mulf %76, %80 : vector<1x256xf32>
    %c14_i32_21 = arith.constant 14 : i32
    %82 = vector.broadcast %c14_i32_21 : i32 to vector<1x256xi32>
    %83 = arith.cmpi sle, %18, %82 : vector<1x256xi32>
    %84 = arith.extui %83 : vector<1x256xi1> to vector<1x256xi32>
    %85 = arith.sitofp %84 : vector<1x256xi32> to vector<1x256xf32>
    %86 = arith.mulf %81, %85 : vector<1x256xf32>
    %c0_22 = arith.constant 0 : index
    %c0_23 = arith.constant 0 : index
    %87 = vector.load %arg2[%c0_22, %c0_23] : memref<16x1xf32, #tpu.memory_space<vmem>>, vector<16x1xf32>
    %c0_24 = arith.constant 0 : index
    %c0_25 = arith.constant 0 : index
    %88 = vector.load %arg3[%c0_24, %c0_25] : memref<16x1xf32, #tpu.memory_space<vmem>>, vector<16x1xf32>
    %cst_26 = arith.constant dense<0.000000e+00> : vector<16xf32>
    %89 = vector.multi_reduction <add>, %1, %cst_26 [1] : vector<16x256xf32> to vector<16xf32>
    %90 = vector.shape_cast %89 : vector<16xf32> to vector<16x1xf32>
    %cst_27 = arith.constant dense<0.000000e+00> : vector<1xf32>
    %91 = vector.multi_reduction <add>, %90, %cst_27 [0] : vector<16x1xf32> to vector<1xf32>
    %92 = vector.shape_cast %91 : vector<1xf32> to vector<1x1xf32>
    %cst_28 = arith.constant 4.096000e+03 : f32
    %93 = vector.broadcast %cst_28 : f32 to vector<1x1xf32>
    %94 = arith.divf %92, %93 : vector<1x1xf32>
    %95 = vector.broadcast %94 : vector<1x1xf32> to vector<16x256xf32>
    %96 = arith.subf %1, %95 : vector<16x256xf32>
    %97 = arith.mulf %96, %96 : vector<16x256xf32>
    %cst_29 = arith.constant dense<0.000000e+00> : vector<16xf32>
    %98 = vector.multi_reduction <add>, %97, %cst_29 [1] : vector<16x256xf32> to vector<16xf32>
    %99 = vector.shape_cast %98 : vector<16xf32> to vector<16x1xf32>
    %cst_30 = arith.constant dense<0.000000e+00> : vector<1xf32>
    %100 = vector.multi_reduction <add>, %99, %cst_30 [0] : vector<16x1xf32> to vector<1xf32>
    %101 = vector.shape_cast %100 : vector<1xf32> to vector<1x1xf32>
    %cst_31 = arith.constant 4.096000e+03 : f32
    %102 = vector.broadcast %cst_31 : f32 to vector<1x1xf32>
    %103 = arith.divf %101, %102 : vector<1x1xf32>
    %cst_32 = arith.constant 9.99999974E-6 : f32
    %104 = vector.broadcast %cst_32 : f32 to vector<1x1xf32>
    %105 = arith.addf %103, %104 : vector<1x1xf32>
    %106 = math.rsqrt %105 : vector<1x1xf32>
    %107 = vector.broadcast %106 : vector<1x1xf32> to vector<16x256xf32>
    %108 = arith.mulf %96, %107 : vector<16x256xf32>
    %109 = vector.broadcast %87 : vector<16x1xf32> to vector<16x256xf32>
    %110 = arith.mulf %108, %109 : vector<16x256xf32>
    %111 = vector.broadcast %88 : vector<16x1xf32> to vector<16x256xf32>
    %112 = arith.addf %110, %111 : vector<16x256xf32>
    %cst_33 = arith.constant 0.000000e+00 : f32
    %113 = vector.broadcast %cst_33 : f32 to vector<16x256xf32>
    %114 = arith.maximumf %112, %113 : vector<16x256xf32>
    %c0_34 = arith.constant 0 : index
    %c0_35 = arith.constant 0 : index
    %115 = vector.load %arg4[%c0_34, %c0_35] : memref<4x16xbf16, #tpu.memory_space<vmem>>, vector<4x16xbf16>
    %116 = arith.truncf %114 : vector<16x256xf32> to vector<16x256xbf16>
    %cst_36 = arith.constant dense<0.000000e+00> : vector<4x256xf32>
    %117 = tpu.matmul %115, %116, %cst_36 {dimension_numbers = #tpu.dot_dimension_numbers<[1], [0], [0], [1], [0, 0, 1, 1], [], []>} : vector<4x16xbf16>, vector<16x256xbf16>, vector<4x256xf32> -> vector<4x256xf32>
    %c0_37 = arith.constant 0 : index
    %c0_38 = arith.constant 0 : index
    %118 = vector.load %arg5[%c0_37, %c0_38] : memref<4x1xf32, #tpu.memory_space<vmem>>, vector<4x1xf32>
    %119 = vector.broadcast %118 : vector<4x1xf32> to vector<4x256xf32>
    %120 = arith.addf %117, %119 : vector<4x256xf32>
    %c0_39 = arith.constant 0 : index
    %c0_40 = arith.constant 0 : index
    %121 = vector.load %arg6[%c0_39, %c0_40] : memref<4x1xf32, #tpu.memory_space<vmem>>, vector<4x1xf32>
    %c0_41 = arith.constant 0 : index
    %c0_42 = arith.constant 0 : index
    %122 = vector.load %arg7[%c0_41, %c0_42] : memref<4x1xf32, #tpu.memory_space<vmem>>, vector<4x1xf32>
    %cst_43 = arith.constant dense<0.000000e+00> : vector<4xf32>
    %123 = vector.multi_reduction <add>, %120, %cst_43 [1] : vector<4x256xf32> to vector<4xf32>
    %124 = vector.shape_cast %123 : vector<4xf32> to vector<4x1xf32>
    %cst_44 = arith.constant dense<0.000000e+00> : vector<1xf32>
    %125 = vector.multi_reduction <add>, %124, %cst_44 [0] : vector<4x1xf32> to vector<1xf32>
    %126 = vector.shape_cast %125 : vector<1xf32> to vector<1x1xf32>
    %cst_45 = arith.constant 1.024000e+03 : f32
    %127 = vector.broadcast %cst_45 : f32 to vector<1x1xf32>
    %128 = arith.divf %126, %127 : vector<1x1xf32>
    %129 = vector.broadcast %128 : vector<1x1xf32> to vector<4x256xf32>
    %130 = arith.subf %120, %129 : vector<4x256xf32>
    %131 = arith.mulf %130, %130 : vector<4x256xf32>
    %cst_46 = arith.constant dense<0.000000e+00> : vector<4xf32>
    %132 = vector.multi_reduction <add>, %131, %cst_46 [1] : vector<4x256xf32> to vector<4xf32>
    %133 = vector.shape_cast %132 : vector<4xf32> to vector<4x1xf32>
    %cst_47 = arith.constant dense<0.000000e+00> : vector<1xf32>
    %134 = vector.multi_reduction <add>, %133, %cst_47 [0] : vector<4x1xf32> to vector<1xf32>
    %135 = vector.shape_cast %134 : vector<1xf32> to vector<1x1xf32>
    %cst_48 = arith.constant 1.024000e+03 : f32
    %136 = vector.broadcast %cst_48 : f32 to vector<1x1xf32>
    %137 = arith.divf %135, %136 : vector<1x1xf32>
    %cst_49 = arith.constant 9.99999974E-6 : f32
    %138 = vector.broadcast %cst_49 : f32 to vector<1x1xf32>
    %139 = arith.addf %137, %138 : vector<1x1xf32>
    %140 = math.rsqrt %139 : vector<1x1xf32>
    %141 = vector.broadcast %140 : vector<1x1xf32> to vector<4x256xf32>
    %142 = arith.mulf %130, %141 : vector<4x256xf32>
    %143 = vector.broadcast %121 : vector<4x1xf32> to vector<4x256xf32>
    %144 = arith.mulf %142, %143 : vector<4x256xf32>
    %145 = vector.broadcast %122 : vector<4x1xf32> to vector<4x256xf32>
    %146 = arith.addf %144, %145 : vector<4x256xf32>
    %cst_50 = arith.constant 0.000000e+00 : f32
    %147 = vector.broadcast %cst_50 : f32 to vector<4x256xf32>
    %148 = arith.maximumf %146, %147 : vector<4x256xf32>
    %c0_51 = arith.constant 0 : index
    %c0_52 = arith.constant 0 : index
    %149 = vector.load %arg8[%c0_51, %c0_52] : memref<4x36xbf16, #tpu.memory_space<vmem>>, vector<4x36xbf16>
    %c0_53 = arith.constant 0 : index
    %c0_54 = arith.constant 0 : index
    %150 = vector.load %arg9[%c0_53, %c0_54] : memref<4x1xf32, #tpu.memory_space<vmem>>, vector<4x1xf32>
    %151 = vector.extract_strided_slice %148 {offsets = [0, 239], sizes = [4, 17], strides = [1, 1]} : vector<4x256xf32> to vector<4x17xf32>
    %152 = vector.extract_strided_slice %148 {offsets = [0, 0], sizes = [4, 239], strides = [1, 1]} : vector<4x256xf32> to vector<4x239xf32>
    %153 = tpu.concatenate %151, %152 in 1 : vector<4x17xf32>, vector<4x239xf32> -> vector<4x256xf32>
    %154 = vector.broadcast %29 : vector<1x256xf32> to vector<4x256xf32>
    %155 = arith.mulf %153, %154 : vector<4x256xf32>
    %156 = vector.extract_strided_slice %148 {offsets = [0, 240], sizes = [4, 16], strides = [1, 1]} : vector<4x256xf32> to vector<4x16xf32>
    %157 = vector.extract_strided_slice %148 {offsets = [0, 0], sizes = [4, 240], strides = [1, 1]} : vector<4x256xf32> to vector<4x240xf32>
    %158 = tpu.concatenate %156, %157 in 1 : vector<4x16xf32>, vector<4x240xf32> -> vector<4x256xf32>
    %159 = vector.broadcast %35 : vector<1x256xf32> to vector<4x256xf32>
    %160 = arith.mulf %158, %159 : vector<4x256xf32>
    %161 = vector.extract_strided_slice %148 {offsets = [0, 241], sizes = [4, 15], strides = [1, 1]} : vector<4x256xf32> to vector<4x15xf32>
    %162 = vector.extract_strided_slice %148 {offsets = [0, 0], sizes = [4, 241], strides = [1, 1]} : vector<4x256xf32> to vector<4x241xf32>
    %163 = tpu.concatenate %161, %162 in 1 : vector<4x15xf32>, vector<4x241xf32> -> vector<4x256xf32>
    %164 = vector.broadcast %46 : vector<1x256xf32> to vector<4x256xf32>
    %165 = arith.mulf %163, %164 : vector<4x256xf32>
    %166 = vector.extract_strided_slice %148 {offsets = [0, 255], sizes = [4, 1], strides = [1, 1]} : vector<4x256xf32> to vector<4x1xf32>
    %167 = vector.extract_strided_slice %148 {offsets = [0, 0], sizes = [4, 255], strides = [1, 1]} : vector<4x256xf32> to vector<4x255xf32>
    %168 = tpu.concatenate %166, %167 in 1 : vector<4x1xf32>, vector<4x255xf32> -> vector<4x256xf32>
    %169 = vector.broadcast %52 : vector<1x256xf32> to vector<4x256xf32>
    %170 = arith.mulf %168, %169 : vector<4x256xf32>
    %171 = vector.extract_strided_slice %148 {offsets = [0, 1], sizes = [4, 255], strides = [1, 1]} : vector<4x256xf32> to vector<4x255xf32>
    %172 = vector.extract_strided_slice %148 {offsets = [0, 0], sizes = [4, 1], strides = [1, 1]} : vector<4x256xf32> to vector<4x1xf32>
    %173 = tpu.concatenate %171, %172 in 1 : vector<4x255xf32>, vector<4x1xf32> -> vector<4x256xf32>
    %174 = vector.broadcast %58 : vector<1x256xf32> to vector<4x256xf32>
    %175 = arith.mulf %173, %174 : vector<4x256xf32>
    %176 = vector.extract_strided_slice %148 {offsets = [0, 15], sizes = [4, 241], strides = [1, 1]} : vector<4x256xf32> to vector<4x241xf32>
    %177 = vector.extract_strided_slice %148 {offsets = [0, 0], sizes = [4, 15], strides = [1, 1]} : vector<4x256xf32> to vector<4x15xf32>
    %178 = tpu.concatenate %176, %177 in 1 : vector<4x241xf32>, vector<4x15xf32> -> vector<4x256xf32>
    %179 = vector.broadcast %69 : vector<1x256xf32> to vector<4x256xf32>
    %180 = arith.mulf %178, %179 : vector<4x256xf32>
    %181 = vector.extract_strided_slice %148 {offsets = [0, 16], sizes = [4, 240], strides = [1, 1]} : vector<4x256xf32> to vector<4x240xf32>
    %182 = vector.extract_strided_slice %148 {offsets = [0, 0], sizes = [4, 16], strides = [1, 1]} : vector<4x256xf32> to vector<4x16xf32>
    %183 = tpu.concatenate %181, %182 in 1 : vector<4x240xf32>, vector<4x16xf32> -> vector<4x256xf32>
    %184 = vector.broadcast %75 : vector<1x256xf32> to vector<4x256xf32>
    %185 = arith.mulf %183, %184 : vector<4x256xf32>
    %186 = vector.extract_strided_slice %148 {offsets = [0, 17], sizes = [4, 239], strides = [1, 1]} : vector<4x256xf32> to vector<4x239xf32>
    %187 = vector.extract_strided_slice %148 {offsets = [0, 0], sizes = [4, 17], strides = [1, 1]} : vector<4x256xf32> to vector<4x17xf32>
    %188 = tpu.concatenate %186, %187 in 1 : vector<4x239xf32>, vector<4x17xf32> -> vector<4x256xf32>
    %189 = vector.broadcast %86 : vector<1x256xf32> to vector<4x256xf32>
    %190 = arith.mulf %188, %189 : vector<4x256xf32>
    %191 = tpu.concatenate %155, %160, %165, %170, %148, %175, %180, %185, %190 in 0 : vector<4x256xf32>, vector<4x256xf32>, vector<4x256xf32>, vector<4x256xf32>, vector<4x256xf32>, vector<4x256xf32>, vector<4x256xf32>, vector<4x256xf32>, vector<4x256xf32> -> vector<36x256xf32>
    %192 = arith.truncf %191 : vector<36x256xf32> to vector<36x256xbf16>
    %cst_55 = arith.constant dense<0.000000e+00> : vector<4x256xf32>
    %193 = tpu.matmul %149, %192, %cst_55 {dimension_numbers = #tpu.dot_dimension_numbers<[1], [0], [0], [1], [0, 0, 1, 1], [], []>} : vector<4x36xbf16>, vector<36x256xbf16>, vector<4x256xf32> -> vector<4x256xf32>
    %194 = vector.broadcast %150 : vector<4x1xf32> to vector<4x256xf32>
    %195 = arith.addf %193, %194 : vector<4x256xf32>
    %c0_56 = arith.constant 0 : index
    %c0_57 = arith.constant 0 : index
    %196 = vector.load %arg10[%c0_56, %c0_57] : memref<4x1xf32, #tpu.memory_space<vmem>>, vector<4x1xf32>
    %c0_58 = arith.constant 0 : index
    %c0_59 = arith.constant 0 : index
    %197 = vector.load %arg11[%c0_58, %c0_59] : memref<4x1xf32, #tpu.memory_space<vmem>>, vector<4x1xf32>
    %cst_60 = arith.constant dense<0.000000e+00> : vector<4xf32>
    %198 = vector.multi_reduction <add>, %195, %cst_60 [1] : vector<4x256xf32> to vector<4xf32>
    %199 = vector.shape_cast %198 : vector<4xf32> to vector<4x1xf32>
    %cst_61 = arith.constant dense<0.000000e+00> : vector<1xf32>
    %200 = vector.multi_reduction <add>, %199, %cst_61 [0] : vector<4x1xf32> to vector<1xf32>
    %201 = vector.shape_cast %200 : vector<1xf32> to vector<1x1xf32>
    %cst_62 = arith.constant 1.024000e+03 : f32
    %202 = vector.broadcast %cst_62 : f32 to vector<1x1xf32>
    %203 = arith.divf %201, %202 : vector<1x1xf32>
    %204 = vector.broadcast %203 : vector<1x1xf32> to vector<4x256xf32>
    %205 = arith.subf %195, %204 : vector<4x256xf32>
    %206 = arith.mulf %205, %205 : vector<4x256xf32>
    %cst_63 = arith.constant dense<0.000000e+00> : vector<4xf32>
    %207 = vector.multi_reduction <add>, %206, %cst_63 [1] : vector<4x256xf32> to vector<4xf32>
    %208 = vector.shape_cast %207 : vector<4xf32> to vector<4x1xf32>
    %cst_64 = arith.constant dense<0.000000e+00> : vector<1xf32>
    %209 = vector.multi_reduction <add>, %208, %cst_64 [0] : vector<4x1xf32> to vector<1xf32>
    %210 = vector.shape_cast %209 : vector<1xf32> to vector<1x1xf32>
    %cst_65 = arith.constant 1.024000e+03 : f32
    %211 = vector.broadcast %cst_65 : f32 to vector<1x1xf32>
    %212 = arith.divf %210, %211 : vector<1x1xf32>
    %cst_66 = arith.constant 9.99999974E-6 : f32
    %213 = vector.broadcast %cst_66 : f32 to vector<1x1xf32>
    %214 = arith.addf %212, %213 : vector<1x1xf32>
    %215 = math.rsqrt %214 : vector<1x1xf32>
    %216 = vector.broadcast %215 : vector<1x1xf32> to vector<4x256xf32>
    %217 = arith.mulf %205, %216 : vector<4x256xf32>
    %218 = vector.broadcast %196 : vector<4x1xf32> to vector<4x256xf32>
    %219 = arith.mulf %217, %218 : vector<4x256xf32>
    %220 = vector.broadcast %197 : vector<4x1xf32> to vector<4x256xf32>
    %221 = arith.addf %219, %220 : vector<4x256xf32>
    %cst_67 = arith.constant 0.000000e+00 : f32
    %222 = vector.broadcast %cst_67 : f32 to vector<4x256xf32>
    %223 = arith.maximumf %221, %222 : vector<4x256xf32>
    %c0_68 = arith.constant 0 : index
    %c0_69 = arith.constant 0 : index
    %224 = vector.load %arg12[%c0_68, %c0_69] : memref<4x36xbf16, #tpu.memory_space<vmem>>, vector<4x36xbf16>
    %c0_70 = arith.constant 0 : index
    %c0_71 = arith.constant 0 : index
    %225 = vector.load %arg13[%c0_70, %c0_71] : memref<4x1xf32, #tpu.memory_space<vmem>>, vector<4x1xf32>
    %226 = vector.extract_strided_slice %223 {offsets = [0, 239], sizes = [4, 17], strides = [1, 1]} : vector<4x256xf32> to vector<4x17xf32>
    %227 = vector.extract_strided_slice %223 {offsets = [0, 0], sizes = [4, 239], strides = [1, 1]} : vector<4x256xf32> to vector<4x239xf32>
    %228 = tpu.concatenate %226, %227 in 1 : vector<4x17xf32>, vector<4x239xf32> -> vector<4x256xf32>
    %229 = vector.broadcast %29 : vector<1x256xf32> to vector<4x256xf32>
    %230 = arith.mulf %228, %229 : vector<4x256xf32>
    %231 = vector.extract_strided_slice %223 {offsets = [0, 240], sizes = [4, 16], strides = [1, 1]} : vector<4x256xf32> to vector<4x16xf32>
    %232 = vector.extract_strided_slice %223 {offsets = [0, 0], sizes = [4, 240], strides = [1, 1]} : vector<4x256xf32> to vector<4x240xf32>
    %233 = tpu.concatenate %231, %232 in 1 : vector<4x16xf32>, vector<4x240xf32> -> vector<4x256xf32>
    %234 = vector.broadcast %35 : vector<1x256xf32> to vector<4x256xf32>
    %235 = arith.mulf %233, %234 : vector<4x256xf32>
    %236 = vector.extract_strided_slice %223 {offsets = [0, 241], sizes = [4, 15], strides = [1, 1]} : vector<4x256xf32> to vector<4x15xf32>
    %237 = vector.extract_strided_slice %223 {offsets = [0, 0], sizes = [4, 241], strides = [1, 1]} : vector<4x256xf32> to vector<4x241xf32>
    %238 = tpu.concatenate %236, %237 in 1 : vector<4x15xf32>, vector<4x241xf32> -> vector<4x256xf32>
    %239 = vector.broadcast %46 : vector<1x256xf32> to vector<4x256xf32>
    %240 = arith.mulf %238, %239 : vector<4x256xf32>
    %241 = vector.extract_strided_slice %223 {offsets = [0, 255], sizes = [4, 1], strides = [1, 1]} : vector<4x256xf32> to vector<4x1xf32>
    %242 = vector.extract_strided_slice %223 {offsets = [0, 0], sizes = [4, 255], strides = [1, 1]} : vector<4x256xf32> to vector<4x255xf32>
    %243 = tpu.concatenate %241, %242 in 1 : vector<4x1xf32>, vector<4x255xf32> -> vector<4x256xf32>
    %244 = vector.broadcast %52 : vector<1x256xf32> to vector<4x256xf32>
    %245 = arith.mulf %243, %244 : vector<4x256xf32>
    %246 = vector.extract_strided_slice %223 {offsets = [0, 1], sizes = [4, 255], strides = [1, 1]} : vector<4x256xf32> to vector<4x255xf32>
    %247 = vector.extract_strided_slice %223 {offsets = [0, 0], sizes = [4, 1], strides = [1, 1]} : vector<4x256xf32> to vector<4x1xf32>
    %248 = tpu.concatenate %246, %247 in 1 : vector<4x255xf32>, vector<4x1xf32> -> vector<4x256xf32>
    %249 = vector.broadcast %58 : vector<1x256xf32> to vector<4x256xf32>
    %250 = arith.mulf %248, %249 : vector<4x256xf32>
    %251 = vector.extract_strided_slice %223 {offsets = [0, 15], sizes = [4, 241], strides = [1, 1]} : vector<4x256xf32> to vector<4x241xf32>
    %252 = vector.extract_strided_slice %223 {offsets = [0, 0], sizes = [4, 15], strides = [1, 1]} : vector<4x256xf32> to vector<4x15xf32>
    %253 = tpu.concatenate %251, %252 in 1 : vector<4x241xf32>, vector<4x15xf32> -> vector<4x256xf32>
    %254 = vector.broadcast %69 : vector<1x256xf32> to vector<4x256xf32>
    %255 = arith.mulf %253, %254 : vector<4x256xf32>
    %256 = vector.extract_strided_slice %223 {offsets = [0, 16], sizes = [4, 240], strides = [1, 1]} : vector<4x256xf32> to vector<4x240xf32>
    %257 = vector.extract_strided_slice %223 {offsets = [0, 0], sizes = [4, 16], strides = [1, 1]} : vector<4x256xf32> to vector<4x16xf32>
    %258 = tpu.concatenate %256, %257 in 1 : vector<4x240xf32>, vector<4x16xf32> -> vector<4x256xf32>
    %259 = vector.broadcast %75 : vector<1x256xf32> to vector<4x256xf32>
    %260 = arith.mulf %258, %259 : vector<4x256xf32>
    %261 = vector.extract_strided_slice %223 {offsets = [0, 17], sizes = [4, 239], strides = [1, 1]} : vector<4x256xf32> to vector<4x239xf32>
    %262 = vector.extract_strided_slice %223 {offsets = [0, 0], sizes = [4, 17], strides = [1, 1]} : vector<4x256xf32> to vector<4x17xf32>
    %263 = tpu.concatenate %261, %262 in 1 : vector<4x239xf32>, vector<4x17xf32> -> vector<4x256xf32>
    %264 = vector.broadcast %86 : vector<1x256xf32> to vector<4x256xf32>
    %265 = arith.mulf %263, %264 : vector<4x256xf32>
    %266 = tpu.concatenate %230, %235, %240, %245, %223, %250, %255, %260, %265 in 0 : vector<4x256xf32>, vector<4x256xf32>, vector<4x256xf32>, vector<4x256xf32>, vector<4x256xf32>, vector<4x256xf32>, vector<4x256xf32>, vector<4x256xf32>, vector<4x256xf32> -> vector<36x256xf32>
    %267 = arith.truncf %266 : vector<36x256xf32> to vector<36x256xbf16>
    %cst_72 = arith.constant dense<0.000000e+00> : vector<4x256xf32>
    %268 = tpu.matmul %224, %267, %cst_72 {dimension_numbers = #tpu.dot_dimension_numbers<[1], [0], [0], [1], [0, 0, 1, 1], [], []>} : vector<4x36xbf16>, vector<36x256xbf16>, vector<4x256xf32> -> vector<4x256xf32>
    %269 = vector.broadcast %225 : vector<4x1xf32> to vector<4x256xf32>
    %270 = arith.addf %268, %269 : vector<4x256xf32>
    %c0_73 = arith.constant 0 : index
    %c0_74 = arith.constant 0 : index
    %271 = vector.load %arg14[%c0_73, %c0_74] : memref<4x1xf32, #tpu.memory_space<vmem>>, vector<4x1xf32>
    %c0_75 = arith.constant 0 : index
    %c0_76 = arith.constant 0 : index
    %272 = vector.load %arg15[%c0_75, %c0_76] : memref<4x1xf32, #tpu.memory_space<vmem>>, vector<4x1xf32>
    %cst_77 = arith.constant dense<0.000000e+00> : vector<4xf32>
    %273 = vector.multi_reduction <add>, %270, %cst_77 [1] : vector<4x256xf32> to vector<4xf32>
    %274 = vector.shape_cast %273 : vector<4xf32> to vector<4x1xf32>
    %cst_78 = arith.constant dense<0.000000e+00> : vector<1xf32>
    %275 = vector.multi_reduction <add>, %274, %cst_78 [0] : vector<4x1xf32> to vector<1xf32>
    %276 = vector.shape_cast %275 : vector<1xf32> to vector<1x1xf32>
    %cst_79 = arith.constant 1.024000e+03 : f32
    %277 = vector.broadcast %cst_79 : f32 to vector<1x1xf32>
    %278 = arith.divf %276, %277 : vector<1x1xf32>
    %279 = vector.broadcast %278 : vector<1x1xf32> to vector<4x256xf32>
    %280 = arith.subf %270, %279 : vector<4x256xf32>
    %281 = arith.mulf %280, %280 : vector<4x256xf32>
    %cst_80 = arith.constant dense<0.000000e+00> : vector<4xf32>
    %282 = vector.multi_reduction <add>, %281, %cst_80 [1] : vector<4x256xf32> to vector<4xf32>
    %283 = vector.shape_cast %282 : vector<4xf32> to vector<4x1xf32>
    %cst_81 = arith.constant dense<0.000000e+00> : vector<1xf32>
    %284 = vector.multi_reduction <add>, %283, %cst_81 [0] : vector<4x1xf32> to vector<1xf32>
    %285 = vector.shape_cast %284 : vector<1xf32> to vector<1x1xf32>
    %cst_82 = arith.constant 1.024000e+03 : f32
    %286 = vector.broadcast %cst_82 : f32 to vector<1x1xf32>
    %287 = arith.divf %285, %286 : vector<1x1xf32>
    %cst_83 = arith.constant 9.99999974E-6 : f32
    %288 = vector.broadcast %cst_83 : f32 to vector<1x1xf32>
    %289 = arith.addf %287, %288 : vector<1x1xf32>
    %290 = math.rsqrt %289 : vector<1x1xf32>
    %291 = vector.broadcast %290 : vector<1x1xf32> to vector<4x256xf32>
    %292 = arith.mulf %280, %291 : vector<4x256xf32>
    %293 = vector.broadcast %271 : vector<4x1xf32> to vector<4x256xf32>
    %294 = arith.mulf %292, %293 : vector<4x256xf32>
    %295 = vector.broadcast %272 : vector<4x1xf32> to vector<4x256xf32>
    %296 = arith.addf %294, %295 : vector<4x256xf32>
    %cst_84 = arith.constant 0.000000e+00 : f32
    %297 = vector.broadcast %cst_84 : f32 to vector<4x256xf32>
    %298 = arith.maximumf %296, %297 : vector<4x256xf32>
    %c0_85 = arith.constant 0 : index
    %c0_86 = arith.constant 0 : index
    %299 = vector.load %arg16[%c0_85, %c0_86] : memref<8x4xbf16, #tpu.memory_space<vmem>>, vector<8x4xbf16>
    %300 = arith.truncf %298 : vector<4x256xf32> to vector<4x256xbf16>
    %cst_87 = arith.constant dense<0.000000e+00> : vector<8x256xf32>
    %301 = tpu.matmul %299, %300, %cst_87 {dimension_numbers = #tpu.dot_dimension_numbers<[1], [0], [0], [1], [0, 0, 1, 1], [], []>} : vector<8x4xbf16>, vector<4x256xbf16>, vector<8x256xf32> -> vector<8x256xf32>
    %c0_88 = arith.constant 0 : index
    %c0_89 = arith.constant 0 : index
    %302 = vector.load %arg17[%c0_88, %c0_89] : memref<8x1xf32, #tpu.memory_space<vmem>>, vector<8x1xf32>
    %303 = vector.broadcast %302 : vector<8x1xf32> to vector<8x256xf32>
    %304 = arith.addf %301, %303 : vector<8x256xf32>
    %305 = vector.extract_strided_slice %114 {offsets = [0, 0], sizes = [8, 256], strides = [1, 1]} : vector<16x256xf32> to vector<8x256xf32>
    %306 = arith.addf %304, %305 : vector<8x256xf32>
    %c0_90 = arith.constant 0 : index
    %c0_91 = arith.constant 0 : index
    %307 = vector.load %arg18[%c0_90, %c0_91] : memref<256x1024xf32, #tpu.memory_space<vmem>>, vector<256x1024xf32>
    %cst_92 = arith.constant dense<0.000000e+00> : vector<8x1024xf32>
    %308 = tpu.matmul %306, %307, %cst_92 {dimension_numbers = #tpu.dot_dimension_numbers<[1], [0], [0], [1], [0, 0, 1, 1], [], []>} : vector<8x256xf32>, vector<256x1024xf32>, vector<8x1024xf32> -> vector<8x1024xf32>
    %c0_93 = arith.constant 0 : index
    %c0_94 = arith.constant 0 : index
    %c0_95 = arith.constant 0 : index
    %309 = vector.load %arg19[%c0_93, %c0_94, %c0_95] : memref<1x8x1024xf32, #tpu.memory_space<vmem>>, vector<1x8x1024xf32>
    %310 = vector.shape_cast %309 : vector<1x8x1024xf32> to vector<8x1024xf32>
    %311 = vector.shape_cast %308 : vector<8x1024xf32> to vector<1x8x1024xf32>
    tpu.vector_store %arg19[%c0_93, %c0_94, %c0_95], %311 {strides = array<i32>} : memref<1x8x1024xf32, #tpu.memory_space<vmem>>, vector<1x8x1024xf32>,
    return
  }
  func.func @transform_0(%arg0: i32) -> (i32, i32, i32) {
    %c0_i32 = arith.constant 0 : i32
    %c0_i32_0 = arith.constant 0 : i32
    %c0_i32_1 = arith.constant 0 : i32
    return %arg0, %c0_i32, %c0_i32_0 : i32, i32, i32
  }
  func.func @transform_1(%arg0: i32) -> (i32, i32) {
    %c0_i32 = arith.constant 0 : i32
    %c0_i32_0 = arith.constant 0 : i32
    %c0_i32_1 = arith.constant 0 : i32
    return %c0_i32, %c0_i32_0 : i32, i32
  }
  func.func @transform_2(%arg0: i32) -> (i32, i32) {
    %c0_i32 = arith.constant 0 : i32
    %c0_i32_0 = arith.constant 0 : i32
    %c0_i32_1 = arith.constant 0 : i32
    return %c0_i32, %c0_i32_0 : i32, i32
  }
  func.func @transform_3(%arg0: i32) -> (i32, i32) {
    %c0_i32 = arith.constant 0 : i32
    %c0_i32_0 = arith.constant 0 : i32
    %c0_i32_1 = arith.constant 0 : i32
    return %c0_i32, %c0_i32_0 : i32, i32
  }
  func.func @transform_4(%arg0: i32) -> (i32, i32) {
    %c0_i32 = arith.constant 0 : i32
    %c0_i32_0 = arith.constant 0 : i32
    %c0_i32_1 = arith.constant 0 : i32
    return %c0_i32, %c0_i32_0 : i32, i32
  }
  func.func @transform_5(%arg0: i32) -> (i32, i32) {
    %c0_i32 = arith.constant 0 : i32
    %c0_i32_0 = arith.constant 0 : i32
    %c0_i32_1 = arith.constant 0 : i32
    return %c0_i32, %c0_i32_0 : i32, i32
  }
  func.func @transform_6(%arg0: i32) -> (i32, i32) {
    %c0_i32 = arith.constant 0 : i32
    %c0_i32_0 = arith.constant 0 : i32
    %c0_i32_1 = arith.constant 0 : i32
    return %c0_i32, %c0_i32_0 : i32, i32
  }
  func.func @transform_7(%arg0: i32) -> (i32, i32) {
    %c0_i32 = arith.constant 0 : i32
    %c0_i32_0 = arith.constant 0 : i32
    %c0_i32_1 = arith.constant 0 : i32
    return %c0_i32, %c0_i32_0 : i32, i32
  }
  func.func @transform_8(%arg0: i32) -> (i32, i32) {
    %c0_i32 = arith.constant 0 : i32
    %c0_i32_0 = arith.constant 0 : i32
    %c0_i32_1 = arith.constant 0 : i32
    return %c0_i32, %c0_i32_0 : i32, i32
  }
  func.func @transform_9(%arg0: i32) -> (i32, i32) {
    %c0_i32 = arith.constant 0 : i32
    %c0_i32_0 = arith.constant 0 : i32
    %c0_i32_1 = arith.constant 0 : i32
    return %c0_i32, %c0_i32_0 : i32, i32
  }
  func.func @transform_10(%arg0: i32) -> (i32, i32) {
    %c0_i32 = arith.constant 0 : i32
    %c0_i32_0 = arith.constant 0 : i32
    %c0_i32_1 = arith.constant 0 : i32
    return %c0_i32, %c0_i32_0 : i32, i32
  }
  func.func @transform_11(%arg0: i32) -> (i32, i32) {
    %c0_i32 = arith.constant 0 : i32
    %c0_i32_0 = arith.constant 0 : i32
    %c0_i32_1 = arith.constant 0 : i32
    return %c0_i32, %c0_i32_0 : i32, i32
  }
  func.func @transform_12(%arg0: i32) -> (i32, i32) {
    %c0_i32 = arith.constant 0 : i32
    %c0_i32_0 = arith.constant 0 : i32
    %c0_i32_1 = arith.constant 0 : i32
    return %c0_i32, %c0_i32_0 : i32, i32
  }
  func.func @transform_13(%arg0: i32) -> (i32, i32) {
    %c0_i32 = arith.constant 0 : i32
    %c0_i32_0 = arith.constant 0 : i32
    %c0_i32_1 = arith.constant 0 : i32
    return %c0_i32, %c0_i32_0 : i32, i32
  }
  func.func @transform_14(%arg0: i32) -> (i32, i32) {
    %c0_i32 = arith.constant 0 : i32
    %c0_i32_0 = arith.constant 0 : i32
    %c0_i32_1 = arith.constant 0 : i32
    return %c0_i32, %c0_i32_0 : i32, i32
  }
  func.func @transform_15(%arg0: i32) -> (i32, i32) {
    %c0_i32 = arith.constant 0 : i32
    %c0_i32_0 = arith.constant 0 : i32
    %c0_i32_1 = arith.constant 0 : i32
    return %c0_i32, %c0_i32_0 : i32, i32
  }
  func.func @transform_16(%arg0: i32) -> (i32, i32) {
    %c0_i32 = arith.constant 0 : i32
    %c0_i32_0 = arith.constant 0 : i32
    %c0_i32_1 = arith.constant 0 : i32
    return %c0_i32, %c0_i32_0 : i32, i32
  }
  func.func @transform_17(%arg0: i32) -> (i32, i32) {
    %c0_i32 = arith.constant 0 : i32
    %c0_i32_0 = arith.constant 0 : i32
    %c0_i32_1 = arith.constant 0 : i32
    return %c0_i32, %c0_i32_0 : i32, i32
  }
  func.func @transform_18(%arg0: i32) -> (i32, i32, i32) {
    %c0_i32 = arith.constant 0 : i32
    %c0_i32_0 = arith.constant 0 : i32
    %c0_i32_1 = arith.constant 0 : i32
    return %arg0, %c0_i32, %c0_i32_0 : i32, i32, i32
  }
}

</mosaic_0001>

<llo_original>
// kernel: tpu_custom_call.1
$region0: #{tpu_custom_call.1}
  #allocation0 [shape = 'u32[]', space=smem, size = 0x4, offset = 0x4, fixed_abs, tag = 'smem constant byte address 0x4 - core index']
  #allocation1 [shape = 'u32[144,128]{1,0:T(1,128)}', space=vmem, size = 0x12000, scoped, tag = 'internal scratch']
  %s0 = inlined_call_operand.vmem [shape: f32[2,16,256], index: 0, kind: input, shape index: {}]
  %s1 = inlined_call_operand.vmem [shape: f32[16,1], index: 1, kind: input, shape index: {}]
  %s2 = inlined_call_operand.vmem [shape: f32[16,1], index: 2, kind: input, shape index: {}]
  %s3 = inlined_call_operand.vmem [shape: bf16[4,16], index: 3, kind: input, shape index: {}]
  %s4 = inlined_call_operand.vmem [shape: f32[4,1], index: 4, kind: input, shape index: {}]
  %s5 = inlined_call_operand.vmem [shape: f32[4,1], index: 5, kind: input, shape index: {}]
  %s6 = inlined_call_operand.vmem [shape: f32[4,1], index: 6, kind: input, shape index: {}]
  %s7 = inlined_call_operand.vmem [shape: bf16[4,36], index: 7, kind: input, shape index: {}]
  %s8 = inlined_call_operand.vmem [shape: f32[4,1], index: 8, kind: input, shape index: {}]
  %s9 = inlined_call_operand.vmem [shape: f32[4,1], index: 9, kind: input, shape index: {}]
  %s10 = inlined_call_operand.vmem [shape: f32[4,1], index: 10, kind: input, shape index: {}]
  %s11 = inlined_call_operand.vmem [shape: bf16[4,36], index: 11, kind: input, shape index: {}]
  %s12 = inlined_call_operand.vmem [shape: f32[4,1], index: 12, kind: input, shape index: {}]
  %s13 = inlined_call_operand.vmem [shape: f32[4,1], index: 13, kind: input, shape index: {}]
  %s14 = inlined_call_operand.vmem [shape: f32[4,1], index: 14, kind: input, shape index: {}]
  %s15 = inlined_call_operand.vmem [shape: bf16[8,4], index: 15, kind: input, shape index: {}]
  %s16 = inlined_call_operand.vmem [shape: f32[8,1], index: 16, kind: input, shape index: {}]
  %s17 = inlined_call_operand.hbm [shape: f32[256,1024], index: 17, kind: input, shape index: {}]
  %s18 = inlined_call_operand.hbm [shape: f32[2,8,1024], index: 18, kind: output, shape index: {}]
  %s19 = sld [smem:[#allocation0]]
  $region109: #{tpu_custom_call.1} parent=0
    _
  %s21 = ssub.s32 1, %s19
  %s22 = scalar_select 0, %s21, %s19
  $region1: #{tpu_custom_call.1} parent=0
    #allocation2 [shape = 'u8[1048576]{0}', space=vmem, size = 0x100000, scoped, tag = 'input window, operand 17, single buffered']
    #allocation3 [shape = 's32[2]{0}', space=sflag, size = 0x8, scoped, tag = 'scoped memory for tpu_custom_call.1']
    #allocation4 [shape = 's32[2]{0}', space=sflag, size = 0x8, scoped, tag = 'scoped memory for tpu_custom_call.1']
    #allocation5 [shape = 'u8[65536]{0}', space=vmem, size = 0x10000, scoped, tag = 'output window, operand 0']
    %23 = vsyncpa [#allocation3], 0
    %24 = vsyncpa [#allocation4], 0
    %s25 = scalar_lea.sflag [#allocation4], 1
    %26 = vsyncpa %s25, 0
    loop: start=0, step=1, limit=4
    $region2: #{tpu_custom_call.1} parent=1 // loop_pre_header
      _
    $region3: #{tpu_custom_call.1} parent=1 // loop_header
      %s28 = sphi 0, %s32
      %p29 = scmp.ge.s32.totalorder %s28, 4
      %s38 = sphi 0, %s40
      %s41 = sphi 0, %s38
      %s42 = sphi 0, %s41
      %s58 = sphi 0, %s42
      %s62 = sphi 0, %s62
      %s64 = sphi 0, %s62
      %s65 = sphi 0, %s64
      %s79 = sphi 0, %s65
      %s83 = sphi 0, %s83
      %s85 = sphi 0, %s83
      %s86 = sphi 0, %s85
      %s100 = sphi 0, %s86
      %s104 = sphi 0, %s104
      %s106 = sphi 0, %s104
      %s107 = sphi 0, %s106
      %s121 = sphi 0, %s107
      %s125 = sphi 0, %s125
      %s127 = sphi 0, %s125
      %s128 = sphi 0, %s127
      %s142 = sphi 0, %s128
      %s146 = sphi 0, %s146
      %s148 = sphi 0, %s146
      %s149 = sphi 0, %s148
      %s163 = sphi 0, %s149
      %s167 = sphi 0, %s167
      %s169 = sphi 0, %s167
      %s170 = sphi 0, %s169
      %s184 = sphi 0, %s170
      %s188 = sphi 0, %s188
      %s190 = sphi 0, %s188
      %s191 = sphi 0, %s190
      %s205 = sphi 0, %s191
      %s209 = sphi 0, %s209
      %s211 = sphi 0, %s209
      %s212 = sphi 0, %s211
      %s226 = sphi 0, %s212
      %s230 = sphi 0, %s230
      %s232 = sphi 0, %s230
      %s233 = sphi 0, %s232
      %s247 = sphi 0, %s233
      %s251 = sphi 0, %s251
      %s253 = sphi 0, %s251
      %s254 = sphi 0, %s253
      %s268 = sphi 0, %s254
      %s272 = sphi 0, %s272
      %s274 = sphi 0, %s272
      %s275 = sphi 0, %s274
      %s289 = sphi 0, %s275
      %s293 = sphi 0, %s293
      %s295 = sphi 0, %s293
      %s296 = sphi 0, %s295
      %s310 = sphi 0, %s296
      %s314 = sphi 0, %s314
      %s316 = sphi 0, %s314
      %s317 = sphi 0, %s316
      %s331 = sphi 0, %s317
      %s335 = sphi 0, %s335
      %s337 = sphi 0, %s335
      %s338 = sphi 0, %s337
      %s352 = sphi 0, %s338
      %s356 = sphi 0, %s356
      %s358 = sphi 0, %s356
      %s359 = sphi 0, %s358
      %s373 = sphi 0, %s359
      %s377 = sphi 0, %s377
      %s379 = sphi 0, %s377
      %s380 = sphi 0, %s379
      %s394 = sphi 0, %s380
      %s398 = sphi 0, %s398
      %s400 = sphi 0, %s398
      %s401 = sphi 0, %s400
      %s415 = sphi 0, %s401
      %s421 = sphi 0, %s423
      %s424 = sphi 0, %s421
      %s425 = sphi 0, %s424
      %s441 = sphi 0, %s425
    $region4: #{tpu_custom_call.1} parent=1 // loop_header_branch
      %31 = sbr.rel (%p29) target = $region8
    $region5: #{tpu_custom_call.1} parent=1 // loop_body
      %s33 = ssub.s32 %s28, 1
      %s34 = ssub.s32 %s28, 2
      %s35 = sadd.s32 %s28, 1
      %s36 = ssub.s32 %s28, %s35
      %p37 = scmp.eq.s32.totalorder %s36, 0
      %s39 = sadd.s32 %s38, 1
      %s40 = scalar_select %p37, %s38, %s39
      %p43 = pneg %p37
      %p44 = scmp.eq.s32.totalorder %s28, 1
      %p45 = por %p43, %p44
      %p46 = scmp.ne.s32.totalorder %s38, %s41
      %p47 = scmp.eq.s32.totalorder %s28, 0
      %p48 = por %p46, %p47
      %p49 = scmp.ne.s32.totalorder %s38, %s41
      %p50 = scmp.eq.s32.totalorder %s33, 1
      %p51 = por %p49, %p50
      %p52 = scmp.ne.s32.totalorder %s41, %s42
      %p53 = scmp.eq.s32.totalorder %s33, 0
      %p54 = por %p52, %p53
      %p55 = scmp.ne.s32.totalorder %s41, %s42
      %p56 = scmp.eq.s32.totalorder %s34, 1
      %p57 = por %p55, %p56
      %p59 = scmp.ne.s32.totalorder %s42, %s58
      %p60 = scmp.eq.s32.totalorder %s34, 0
      %p61 = por %p59, %p60
      %s63 = sadd.s32 %s62, 1
      %p66 = scmp.eq.s32.totalorder %s28, 1
      %p67 = scmp.ne.s32.totalorder %s62, %s64
      %p68 = scmp.eq.s32.totalorder %s28, 0
      %p69 = por %p67, %p68
      %p70 = scmp.ne.s32.totalorder %s62, %s64
      %p71 = scmp.eq.s32.totalorder %s33, 1
      %p72 = por %p70, %p71
      %p73 = scmp.ne.s32.totalorder %s64, %s65
      %p74 = scmp.eq.s32.totalorder %s33, 0
      %p75 = por %p73, %p74
      %p76 = scmp.ne.s32.totalorder %s64, %s65
      %p77 = scmp.eq.s32.totalorder %s34, 1
      %p78 = por %p76, %p77
      %p80 = scmp.ne.s32.totalorder %s65, %s79
      %p81 = scmp.eq.s32.totalorder %s34, 0
      %p82 = por %p80, %p81
      %s84 = sadd.s32 %s83, 1
      %p87 = scmp.eq.s32.totalorder %s28, 1
      %p88 = scmp.ne.s32.totalorder %s83, %s85
      %p89 = scmp.eq.s32.totalorder %s28, 0
      %p90 = por %p88, %p89
      %p91 = scmp.ne.s32.totalorder %s83, %s85
      %p92 = scmp.eq.s32.totalorder %s33, 1
      %p93 = por %p91, %p92
      %p94 = scmp.ne.s32.totalorder %s85, %s86
      %p95 = scmp.eq.s32.totalorder %s33, 0
      %p96 = por %p94, %p95
      %p97 = scmp.ne.s32.totalorder %s85, %s86
      %p98 = scmp.eq.s32.totalorder %s34, 1
      %p99 = por %p97, %p98
      %p101 = scmp.ne.s32.totalorder %s86, %s100
      %p102 = scmp.eq.s32.totalorder %s34, 0
      %p103 = por %p101, %p102
      %s105 = sadd.s32 %s104, 1
      %p108 = scmp.eq.s32.totalorder %s28, 1
      %p109 = scmp.ne.s32.totalorder %s104, %s106
      %p110 = scmp.eq.s32.totalorder %s28, 0
      %p111 = por %p109, %p110
      %p112 = scmp.ne.s32.totalorder %s104, %s106
      %p113 = scmp.eq.s32.totalorder %s33, 1
      %p114 = por %p112, %p113
      %p115 = scmp.ne.s32.totalorder %s106, %s107
      %p116 = scmp.eq.s32.totalorder %s33, 0
      %p117 = por %p115, %p116
      %p118 = scmp.ne.s32.totalorder %s106, %s107
      %p119 = scmp.eq.s32.totalorder %s34, 1
      %p120 = por %p118, %p119
      %p122 = scmp.ne.s32.totalorder %s107, %s121
      %p123 = scmp.eq.s32.totalorder %s34, 0
      %p124 = por %p122, %p123
      %s126 = sadd.s32 %s125, 1
      %p129 = scmp.eq.s32.totalorder %s28, 1
      %p130 = scmp.ne.s32.totalorder %s125, %s127
      %p131 = scmp.eq.s32.totalorder %s28, 0
      %p132 = por %p130, %p131
      %p133 = scmp.ne.s32.totalorder %s125, %s127
      %p134 = scmp.eq.s32.totalorder %s33, 1
      %p135 = por %p133, %p134
      %p136 = scmp.ne.s32.totalorder %s127, %s128
      %p137 = scmp.eq.s32.totalorder %s33, 0
      %p138 = por %p136, %p137
      %p139 = scmp.ne.s32.totalorder %s127, %s128
      %p140 = scmp.eq.s32.totalorder %s34, 1
      %p141 = por %p139, %p140
      %p143 = scmp.ne.s32.totalorder %s128, %s142
      %p144 = scmp.eq.s32.totalorder %s34, 0
      %p145 = por %p143, %p144
      %s147 = sadd.s32 %s146, 1
      %p150 = scmp.eq.s32.totalorder %s28, 1
      %p151 = scmp.ne.s32.totalorder %s146, %s148
      %p152 = scmp.eq.s32.totalorder %s28, 0
      %p153 = por %p151, %p152
      %p154 = scmp.ne.s32.totalorder %s146, %s148
      %p155 = scmp.eq.s32.totalorder %s33, 1
      %p156 = por %p154, %p155
      %p157 = scmp.ne.s32.totalorder %s148, %s149
      %p158 = scmp.eq.s32.totalorder %s33, 0
      %p159 = por %p157, %p158
      %p160 = scmp.ne.s32.totalorder %s148, %s149
      %p161 = scmp.eq.s32.totalorder %s34, 1
      %p162 = por %p160, %p161
      %p164 = scmp.ne.s32.totalorder %s149, %s163
      %p165 = scmp.eq.s32.totalorder %s34, 0
      %p166 = por %p164, %p165
      %s168 = sadd.s32 %s167, 1
      %p171 = scmp.eq.s32.totalorder %s28, 1
      %p172 = scmp.ne.s32.totalorder %s167, %s169
      %p173 = scmp.eq.s32.totalorder %s28, 0
      %p174 = por %p172, %p173
      %p175 = scmp.ne.s32.totalorder %s167, %s169
      %p176 = scmp.eq.s32.totalorder %s33, 1
      %p177 = por %p175, %p176
      %p178 = scmp.ne.s32.totalorder %s169, %s170
      %p179 = scmp.eq.s32.totalorder %s33, 0
      %p180 = por %p178, %p179
      %p181 = scmp.ne.s32.totalorder %s169, %s170
      %p182 = scmp.eq.s32.totalorder %s34, 1
      %p183 = por %p181, %p182
      %p185 = scmp.ne.s32.totalorder %s170, %s184
      %p186 = scmp.eq.s32.totalorder %s34, 0
      %p187 = por %p185, %p186
      %s189 = sadd.s32 %s188, 1
      %p192 = scmp.eq.s32.totalorder %s28, 1
      %p193 = scmp.ne.s32.totalorder %s188, %s190
      %p194 = scmp.eq.s32.totalorder %s28, 0
      %p195 = por %p193, %p194
      %p196 = scmp.ne.s32.totalorder %s188, %s190
      %p197 = scmp.eq.s32.totalorder %s33, 1
      %p198 = por %p196, %p197
      %p199 = scmp.ne.s32.totalorder %s190, %s191
      %p200 = scmp.eq.s32.totalorder %s33, 0
      %p201 = por %p199, %p200
      %p202 = scmp.ne.s32.totalorder %s190, %s191
      %p203 = scmp.eq.s32.totalorder %s34, 1
      %p204 = por %p202, %p203
      %p206 = scmp.ne.s32.totalorder %s191, %s205
      %p207 = scmp.eq.s32.totalorder %s34, 0
      %p208 = por %p206, %p207
      %s210 = sadd.s32 %s209, 1
      %p213 = scmp.eq.s32.totalorder %s28, 1
      %p214 = scmp.ne.s32.totalorder %s209, %s211
      %p215 = scmp.eq.s32.totalorder %s28, 0
      %p216 = por %p214, %p215
      %p217 = scmp.ne.s32.totalorder %s209, %s211
      %p218 = scmp.eq.s32.totalorder %s33, 1
      %p219 = por %p217, %p218
      %p220 = scmp.ne.s32.totalorder %s211, %s212
      %p221 = scmp.eq.s32.totalorder %s33, 0
      %p222 = por %p220, %p221
      %p223 = scmp.ne.s32.totalorder %s211, %s212
      %p224 = scmp.eq.s32.totalorder %s34, 1
      %p225 = por %p223, %p224
      %p227 = scmp.ne.s32.totalorder %s212, %s226
      %p228 = scmp.eq.s32.totalorder %s34, 0
      %p229 = por %p227, %p228
      %s231 = sadd.s32 %s230, 1
      %p234 = scmp.eq.s32.totalorder %s28, 1
      %p235 = scmp.ne.s32.totalorder %s230, %s232
      %p236 = scmp.eq.s32.totalorder %s28, 0
      %p237 = por %p235, %p236
      %p238 = scmp.ne.s32.totalorder %s230, %s232
      %p239 = scmp.eq.s32.totalorder %s33, 1
      %p240 = por %p238, %p239
      %p241 = scmp.ne.s32.totalorder %s232, %s233
      %p242 = scmp.eq.s32.totalorder %s33, 0
      %p243 = por %p241, %p242
      %p244 = scmp.ne.s32.totalorder %s232, %s233
      %p245 = scmp.eq.s32.totalorder %s34, 1
      %p246 = por %p244, %p245
      %p248 = scmp.ne.s32.totalorder %s233, %s247
      %p249 = scmp.eq.s32.totalorder %s34, 0
      %p250 = por %p248, %p249
      %s252 = sadd.s32 %s251, 1
      %p255 = scmp.eq.s32.totalorder %s28, 1
      %p256 = scmp.ne.s32.totalorder %s251, %s253
      %p257 = scmp.eq.s32.totalorder %s28, 0
      %p258 = por %p256, %p257
      %p259 = scmp.ne.s32.totalorder %s251, %s253
      %p260 = scmp.eq.s32.totalorder %s33, 1
      %p261 = por %p259, %p260
      %p262 = scmp.ne.s32.totalorder %s253, %s254
      %p263 = scmp.eq.s32.totalorder %s33, 0
      %p264 = por %p262, %p263
      %p265 = scmp.ne.s32.totalorder %s253, %s254
      %p266 = scmp.eq.s32.totalorder %s34, 1
      %p267 = por %p265, %p266
      %p269 = scmp.ne.s32.totalorder %s254, %s268
      %p270 = scmp.eq.s32.totalorder %s34, 0
      %p271 = por %p269, %p270
      %s273 = sadd.s32 %s272, 1
      %p276 = scmp.eq.s32.totalorder %s28, 1
      %p277 = scmp.ne.s32.totalorder %s272, %s274
      %p278 = scmp.eq.s32.totalorder %s28, 0
      %p279 = por %p277, %p278
      %p280 = scmp.ne.s32.totalorder %s272, %s274
      %p281 = scmp.eq.s32.totalorder %s33, 1
      %p282 = por %p280, %p281
      %p283 = scmp.ne.s32.totalorder %s274, %s275
      %p284 = scmp.eq.s32.totalorder %s33, 0
      %p285 = por %p283, %p284
      %p286 = scmp.ne.s32.totalorder %s274, %s275
      %p287 = scmp.eq.s32.totalorder %s34, 1
      %p288 = por %p286, %p287
      %p290 = scmp.ne.s32.totalorder %s275, %s289
      %p291 = scmp.eq.s32.totalorder %s34, 0
      %p292 = por %p290, %p291
      %s294 = sadd.s32 %s293, 1
      %p297 = scmp.eq.s32.totalorder %s28, 1
      %p298 = scmp.ne.s32.totalorder %s293, %s295
      %p299 = scmp.eq.s32.totalorder %s28, 0
      %p300 = por %p298, %p299
      %p301 = scmp.ne.s32.totalorder %s293, %s295
      %p302 = scmp.eq.s32.totalorder %s33, 1
      %p303 = por %p301, %p302
      %p304 = scmp.ne.s32.totalorder %s295, %s296
      %p305 = scmp.eq.s32.totalorder %s33, 0
      %p306 = por %p304, %p305
      %p307 = scmp.ne.s32.totalorder %s295, %s296
      %p308 = scmp.eq.s32.totalorder %s34, 1
      %p309 = por %p307, %p308
      %p311 = scmp.ne.s32.totalorder %s296, %s310
      %p312 = scmp.eq.s32.totalorder %s34, 0
      %p313 = por %p311, %p312
      %s315 = sadd.s32 %s314, 1
      %p318 = scmp.eq.s32.totalorder %s28, 1
      %p319 = scmp.ne.s32.totalorder %s314, %s316
      %p320 = scmp.eq.s32.totalorder %s28, 0
      %p321 = por %p319, %p320
      %p322 = scmp.ne.s32.totalorder %s314, %s316
      %p323 = scmp.eq.s32.totalorder %s33, 1
      %p324 = por %p322, %p323
      %p325 = scmp.ne.s32.totalorder %s316, %s317
      %p326 = scmp.eq.s32.totalorder %s33, 0
      %p327 = por %p325, %p326
      %p328 = scmp.ne.s32.totalorder %s316, %s317
      %p329 = scmp.eq.s32.totalorder %s34, 1
      %p330 = por %p328, %p329
      %p332 = scmp.ne.s32.totalorder %s317, %s331
      %p333 = scmp.eq.s32.totalorder %s34, 0
      %p334 = por %p332, %p333
      %s336 = sadd.s32 %s335, 1
      %p339 = scmp.eq.s32.totalorder %s28, 1
      %p340 = scmp.ne.s32.totalorder %s335, %s337
      %p341 = scmp.eq.s32.totalorder %s28, 0
      %p342 = por %p340, %p341
      %p343 = scmp.ne.s32.totalorder %s335, %s337
      %p344 = scmp.eq.s32.totalorder %s33, 1
      %p345 = por %p343, %p344
      %p346 = scmp.ne.s32.totalorder %s337, %s338
      %p347 = scmp.eq.s32.totalorder %s33, 0
      %p348 = por %p346, %p347
      %p349 = scmp.ne.s32.totalorder %s337, %s338
      %p350 = scmp.eq.s32.totalorder %s34, 1
      %p351 = por %p349, %p350
      %p353 = scmp.ne.s32.totalorder %s338, %s352
      %p354 = scmp.eq.s32.totalorder %s34, 0
      %p355 = por %p353, %p354
      %s357 = sadd.s32 %s356, 1
      %p360 = scmp.eq.s32.totalorder %s28, 1
      %p361 = scmp.ne.s32.totalorder %s356, %s358
      %p362 = scmp.eq.s32.totalorder %s28, 0
      %p363 = por %p361, %p362
      %p364 = scmp.ne.s32.totalorder %s356, %s358
      %p365 = scmp.eq.s32.totalorder %s33, 1
      %p366 = por %p364, %p365
      %p367 = scmp.ne.s32.totalorder %s358, %s359
      %p368 = scmp.eq.s32.totalorder %s33, 0
      %p369 = por %p367, %p368
      %p370 = scmp.ne.s32.totalorder %s358, %s359
      %p371 = scmp.eq.s32.totalorder %s34, 1
      %p372 = por %p370, %p371
      %p374 = scmp.ne.s32.totalorder %s359, %s373
      %p375 = scmp.eq.s32.totalorder %s34, 0
      %p376 = por %p374, %p375
      %s378 = sadd.s32 %s377, 1
      %p381 = scmp.eq.s32.totalorder %s28, 1
      %p382 = scmp.ne.s32.totalorder %s377, %s379
      %p383 = scmp.eq.s32.totalorder %s28, 0
      %p384 = por %p382, %p383
      %p385 = scmp.ne.s32.totalorder %s377, %s379
      %p386 = scmp.eq.s32.totalorder %s33, 1
      %p387 = por %p385, %p386
      %p388 = scmp.ne.s32.totalorder %s379, %s380
      %p389 = scmp.eq.s32.totalorder %s33, 0
      %p390 = por %p388, %p389
      %p391 = scmp.ne.s32.totalorder %s379, %s380
      %p392 = scmp.eq.s32.totalorder %s34, 1
      %p393 = por %p391, %p392
      %p395 = scmp.ne.s32.totalorder %s380, %s394
      %p396 = scmp.eq.s32.totalorder %s34, 0
      %p397 = por %p395, %p396
      %s399 = sadd.s32 %s398, 1
      %p402 = scmp.eq.s32.totalorder %s28, 1
      %p403 = scmp.ne.s32.totalorder %s398, %s400
      %p404 = scmp.eq.s32.totalorder %s28, 0
      %p405 = por %p403, %p404
      %p406 = scmp.ne.s32.totalorder %s398, %s400
      %p407 = scmp.eq.s32.totalorder %s33, 1
      %p408 = por %p406, %p407
      %p409 = scmp.ne.s32.totalorder %s400, %s401
      %p410 = scmp.eq.s32.totalorder %s33, 0
      %p411 = por %p409, %p410
      %p412 = scmp.ne.s32.totalorder %s400, %s401
      %p413 = scmp.eq.s32.totalorder %s34, 1
      %p414 = por %p412, %p413
      %p416 = scmp.ne.s32.totalorder %s401, %s415
      %p417 = scmp.eq.s32.totalorder %s34, 0
      %p418 = por %p416, %p417
      %s419 = ssub.s32 %s28, %s35
      %p420 = scmp.eq.s32.totalorder %s419, 0
      %s422 = sadd.s32 %s421, 1
      %s423 = scalar_select %p420, %s421, %s422
      %p426 = pneg %p420
      %p427 = scmp.eq.s32.totalorder %s28, 1
      %p428 = por %p426, %p427
      %p429 = scmp.ne.s32.totalorder %s421, %s424
      %p430 = scmp.eq.s32.totalorder %s28, 0
      %p431 = por %p429, %p430
      %p432 = scmp.ne.s32.totalorder %s421, %s424
      %p433 = scmp.eq.s32.totalorder %s33, 1
      %p434 = por %p432, %p433
      %p435 = scmp.ne.s32.totalorder %s424, %s425
      %p436 = scmp.eq.s32.totalorder %s33, 0
      %p437 = por %p435, %p436
      %p438 = scmp.ne.s32.totalorder %s424, %s425
      %p439 = scmp.eq.s32.totalorder %s34, 1
      %p440 = por %p438, %p439
      %p442 = scmp.ne.s32.totalorder %s425, %s441
      %p443 = scmp.eq.s32.totalorder %s34, 0
      %p444 = por %p442, %p443
      %p445 = scmp.le.s32.totalorder 1, %s28
      %p446 = scmp.lt.s32.totalorder %s28, 3
      %p447 = pnand %p445, %p446
      %p448 = pneg %p447
      // Predicated region
      $region9: #{tpu_custom_call.1} parent=5 // pred_check
        _
      $region10: #{tpu_custom_call.1} parent=5 // pred_check_branch
        %450 = sbr.rel (%p447) target = $region12
      $region11: #{tpu_custom_call.1} parent=5 // pred_region
        %s451 = ssub.s32 %s28, 1
        // Predicated region
        $region13: #{tpu_custom_call.1} parent=11 // pred_check
          %p452 = pneg %p75
        $region14: #{tpu_custom_call.1} parent=11 // pred_check_branch
          %454 = sbr.rel (%p452) target = $region16
        $region15: #{tpu_custom_call.1} parent=11 // pred_region
          _
        $region16: #{tpu_custom_call.1} parent=11 // pred_fallthru
          _
        // Predicated region
        $region17: #{tpu_custom_call.1} parent=11 // pred_check
          %p455 = pneg %p96
        $region18: #{tpu_custom_call.1} parent=11 // pred_check_branch
          %457 = sbr.rel (%p455) target = $region20
        $region19: #{tpu_custom_call.1} parent=11 // pred_region
          _
        $region20: #{tpu_custom_call.1} parent=11 // pred_fallthru
          _
        // Predicated region
        $region21: #{tpu_custom_call.1} parent=11 // pred_check
          %p458 = pneg %p117
        $region22: #{tpu_custom_call.1} parent=11 // pred_check_branch
          %460 = sbr.rel (%p458) target = $region24
        $region23: #{tpu_custom_call.1} parent=11 // pred_region
          _
        $region24: #{tpu_custom_call.1} parent=11 // pred_fallthru
          _
        // Predicated region
        $region25: #{tpu_custom_call.1} parent=11 // pred_check
          %p461 = pneg %p138
        $region26: #{tpu_custom_call.1} parent=11 // pred_check_branch
          %463 = sbr.rel (%p461) target = $region28
        $region27: #{tpu_custom_call.1} parent=11 // pred_region
          _
        $region28: #{tpu_custom_call.1} parent=11 // pred_fallthru
          _
        // Predicated region
        $region29: #{tpu_custom_call.1} parent=11 // pred_check
          %p464 = pneg %p159
        $region30: #{tpu_custom_call.1} parent=11 // pred_check_branch
          %466 = sbr.rel (%p464) target = $region32
        $region31: #{tpu_custom_call.1} parent=11 // pred_region
          _
        $region32: #{tpu_custom_call.1} parent=11 // pred_fallthru
          _
        // Predicated region
        $region33: #{tpu_custom_call.1} parent=11 // pred_check
          %p467 = pneg %p180
        $region34: #{tpu_custom_call.1} parent=11 // pred_check_branch
          %469 = sbr.rel (%p467) target = $region36
        $region35: #{tpu_custom_call.1} parent=11 // pred_region
          _
        $region36: #{tpu_custom_call.1} parent=11 // pred_fallthru
          _
        // Predicated region
        $region37: #{tpu_custom_call.1} parent=11 // pred_check
          %p470 = pneg %p201
        $region38: #{tpu_custom_call.1} parent=11 // pred_check_branch
          %472 = sbr.rel (%p470) target = $region40
        $region39: #{tpu_custom_call.1} parent=11 // pred_region
          _
        $region40: #{tpu_custom_call.1} parent=11 // pred_fallthru
          _
        // Predicated region
        $region41: #{tpu_custom_call.1} parent=11 // pred_check
          %p473 = pneg %p222
        $region42: #{tpu_custom_call.1} parent=11 // pred_check_branch
          %475 = sbr.rel (%p473) target = $region44
        $region43: #{tpu_custom_call.1} parent=11 // pred_region
          _
        $region44: #{tpu_custom_call.1} parent=11 // pred_fallthru
          _
        // Predicated region
        $region45: #{tpu_custom_call.1} parent=11 // pred_check
          %p476 = pneg %p243
        $region46: #{tpu_custom_call.1} parent=11 // pred_check_branch
          %478 = sbr.rel (%p476) target = $region48
        $region47: #{tpu_custom_call.1} parent=11 // pred_region
          _
        $region48: #{tpu_custom_call.1} parent=11 // pred_fallthru
          _
        // Predicated region
        $region49: #{tpu_custom_call.1} parent=11 // pred_check
          %p479 = pneg %p264
        $region50: #{tpu_custom_call.1} parent=11 // pred_check_branch
          %481 = sbr.rel (%p479) target = $region52
        $region51: #{tpu_custom_call.1} parent=11 // pred_region
          _
        $region52: #{tpu_custom_call.1} parent=11 // pred_fallthru
          _
        // Predicated region
        $region53: #{tpu_custom_call.1} parent=11 // pred_check
          %p482 = pneg %p285
        $region54: #{tpu_custom_call.1} parent=11 // pred_check_branch
          %484 = sbr.rel (%p482) target = $region56
        $region55: #{tpu_custom_call.1} parent=11 // pred_region
          _
        $region56: #{tpu_custom_call.1} parent=11 // pred_fallthru
          _
        // Predicated region
        $region57: #{tpu_custom_call.1} parent=11 // pred_check
          %p485 = pneg %p306
        $region58: #{tpu_custom_call.1} parent=11 // pred_check_branch
          %487 = sbr.rel (%p485) target = $region60
        $region59: #{tpu_custom_call.1} parent=11 // pred_region
          _
        $region60: #{tpu_custom_call.1} parent=11 // pred_fallthru
          _
        // Predicated region
        $region61: #{tpu_custom_call.1} parent=11 // pred_check
          %p488 = pneg %p327
        $region62: #{tpu_custom_call.1} parent=11 // pred_check_branch
          %490 = sbr.rel (%p488) target = $region64
        $region63: #{tpu_custom_call.1} parent=11 // pred_region
          _
        $region64: #{tpu_custom_call.1} parent=11 // pred_fallthru
          _
        // Predicated region
        $region65: #{tpu_custom_call.1} parent=11 // pred_check
          %p491 = pneg %p348
        $region66: #{tpu_custom_call.1} parent=11 // pred_check_branch
          %493 = sbr.rel (%p491) target = $region68
        $region67: #{tpu_custom_call.1} parent=11 // pred_region
          _
        $region68: #{tpu_custom_call.1} parent=11 // pred_fallthru
          _
        // Predicated region
        $region69: #{tpu_custom_call.1} parent=11 // pred_check
          %p494 = pneg %p369
        $region70: #{tpu_custom_call.1} parent=11 // pred_check_branch
          %496 = sbr.rel (%p494) target = $region72
        $region71: #{tpu_custom_call.1} parent=11 // pred_region
          _
        $region72: #{tpu_custom_call.1} parent=11 // pred_fallthru
          _
        // Predicated region
        $region73: #{tpu_custom_call.1} parent=11 // pred_check
          %p497 = pneg %p390
        $region74: #{tpu_custom_call.1} parent=11 // pred_check_branch
          %499 = sbr.rel (%p497) target = $region76
        $region75: #{tpu_custom_call.1} parent=11 // pred_region
          _
        $region76: #{tpu_custom_call.1} parent=11 // pred_fallthru
          _
        // Predicated region
        $region77: #{tpu_custom_call.1} parent=11 // pred_check
          %p500 = pneg %p411
        $region78: #{tpu_custom_call.1} parent=11 // pred_check_branch
          %502 = sbr.rel (%p500) target = $region80
        $region79: #{tpu_custom_call.1} parent=11 // pred_region
          %s504 = ssub.s32 32768, 32768
          %505 = vsyncadd [#allocation3], %s504
          %s506 = sshll.u32 [#allocation2], 4
          %s507 = int_to_ptr.vmem [resolvable:$true] %s506
          %512 = dma.hbm_to_vmem [thread:$0]  %s17, 32768, %s507, [#allocation3], 1024, 1024, 64
        $region80: #{tpu_custom_call.1} parent=11 // pred_fallthru
          _
      $region12: #{tpu_custom_call.1} parent=5 // pred_fallthru
        _
      %p513 = scmp.lt.s32.totalorder %s28, 2
      // Predicated region
      $region81: #{tpu_custom_call.1} parent=5 // pred_check
        %p514 = pneg %p513
      $region82: #{tpu_custom_call.1} parent=5 // pred_check_branch
        %516 = sbr.rel (%p514) target = $region84
      $region83: #{tpu_custom_call.1} parent=5 // pred_region
        // Predicated region
        $region85: #{tpu_custom_call.1} parent=83 // pred_check
          %p517 = pneg %p48
        $region86: #{tpu_custom_call.1} parent=83 // pred_check_branch
          %519 = sbr.rel (%p517) target = $region88
        $region87: #{tpu_custom_call.1} parent=83 // pred_region
          %p520 = scmp.lt.s32.totalorder %s28, 1
          %s521 = scalar_select %p520, %s28, 1
          %s522 = smul.addr %s521, 4
          %s523 = smul.addr %s522, 8
          %s524 = scalar_lea.vmem %s0, %s523
        $region88: #{tpu_custom_call.1} parent=83 // pred_fallthru
          _
      $region84: #{tpu_custom_call.1} parent=5 // pred_fallthru
        _
      %p525 = scmp.le.s32.totalorder 1, %s28
      %p526 = scmp.lt.s32.totalorder %s28, 3
      %p527 = pnand %p525, %p526
      %p528 = pneg %p527
      // Predicated region
      $region89: #{tpu_custom_call.1} parent=5 // pred_check
        _
      $region90: #{tpu_custom_call.1} parent=5 // pred_check_branch
        %530 = sbr.rel (%p527) target = $region92
      $region91: #{tpu_custom_call.1} parent=5 // pred_region
        %s531 = ssub.s32 %s28, 1
        // Predicated region
        $region93: #{tpu_custom_call.1} parent=91 // pred_check
          %p532 = pneg %p411
        $region94: #{tpu_custom_call.1} parent=91 // pred_check_branch
          %534 = sbr.rel (%p532) target = $region96
        $region95: #{tpu_custom_call.1} parent=91 // pred_region
          %535 = dma.done [#allocation3], 32768
        $region96: #{tpu_custom_call.1} parent=91 // pred_fallthru
          _
        %p536 = scmp.lt.s32.totalorder %s33, 1
        %s537 = scalar_select %p536, %s33, 1
        %s538 = smul.addr %s537, 4
        %s539 = smul.addr %s538, 8
        %s540 = scalar_lea.vmem %s0, %s539
        %p541 = pneg %p54
        %p542 = pneg %p51
        %p543 = pneg %p75
        %p544 = pneg %p72
        %p545 = pneg %p96
        %p546 = pneg %p93
        %p547 = pneg %p117
        %p548 = pneg %p114
        %p549 = pneg %p138
        %p550 = pneg %p135
        %p551 = pneg %p159
        %p552 = pneg %p156
        %p553 = pneg %p180
        %p554 = pneg %p177
        %p555 = pneg %p201
        %p556 = pneg %p198
        %p557 = pneg %p222
        %p558 = pneg %p219
        %p559 = pneg %p243
        %p560 = pneg %p240
        %p561 = pneg %p264
        %p562 = pneg %p261
        %p563 = pneg %p285
        %p564 = pneg %p282
        %p565 = pneg %p306
        %p566 = pneg %p303
        %p567 = pneg %p327
        %p568 = pneg %p324
        %p569 = pneg %p348
        %p570 = pneg %p345
        %p571 = pneg %p369
        %p572 = pneg %p366
        %p573 = pneg %p390
        %p574 = pneg %p387
        %p575 = pneg %p411
        %p576 = pneg %p408
        %p577 = pneg %p437
        %p578 = pneg %p434
        %s579 = sand.u32 %s424, 1
        %s580 = scalar_lea.sflag [#allocation4], %s579
        %s581 = sand.u32 %s424, 1
        %s582 = smul.addr %s581, 64
        %s583 = scalar_lea.vmem [#allocation5], %s582
        %p584 = scmp.lt.s32.totalorder %s33, 1
        %s585 = scalar_select %p584, %s33, 1
        %s586 = smul.addr %s585, 4
        %s587 = smul.addr %s586, 8
        %s588 = scalar_lea.vmem %s0, %s587
        %v590 = vld [vmem:[%s588] sm:$0xff]
        %v591 = vld [vmem:[%s588 + $0x8] sm:$0xff]
        %v592 = vld [vmem:[%s588 + $0x10] sm:$0xff]
        %v593 = vld [vmem:[%s588 + $0x18] sm:$0xff]
        %v594 = vlaneseq
        %v595 = vand.u32 %v594, 127
        %v596 = vadd.s32 %v595, 128
        %vm597 = vcmp.lt.s32.totalorder %v595, 0
        %v598 = vsub.s32 0, %v595
        %v599 = vsel %vm597, %v598, %v595
        %v600 = vshrl.u32 %v599, 4
        %v601 = vand.u32 %v599, 15
        %v602 = vsub.s32 0, %v601
        %v603 = vsel %vm597, %v602, %v601
        %vm604 = vcmp.lt.s32.totalorder %v596, 0
        %v605 = vsub.s32 0, %v596
        %v606 = vsel %vm604, %v605, %v596
        %v607 = vshrl.u32 %v606, 4
        %v608 = vand.u32 %v606, 15
        %v609 = vsub.s32 0, %v608
        %v610 = vsel %vm604, %v609, %v608
        %vm611 = vcmp.ne.s32.totalorder %v603, 0
        %vm612 = vcmp.ne.s32.totalorder %v610, 0
        %vm613 = vcmp.lt.s32.totalorder %v603, 0
        %vm614 = vcmp.lt.s32.totalorder %v610, 0
        %vm615 = vmand %vm613, %vm611
        %vm616 = vmand %vm614, %vm612
        %v617 = vadd.s32 %v603, 16
        %v618 = vadd.s32 %v610, 16
        %v619 = vsel %vm615, %v617, %v603
        %v620 = vsel %vm616, %v618, %v610
        %vm621 = vcmp.ge.s32.totalorder %v595, 16
        %vm622 = vcmp.ge.s32.totalorder %v596, 16
        %v623 = vsel %vm621, 1, 0
        %v624 = vsel %vm622, 1, 0
        %v625 = vcvt.s32.f32 %v623
        %v626 = vcvt.s32.f32 %v624
        %vm627 = vcmp.ge.s32.totalorder %v619, 1
        %vm628 = vcmp.ge.s32.totalorder %v620, 1
        %v629 = vsel %vm627, 1, 0
        %v630 = vsel %vm628, 1, 0
        %v631 = vcvt.s32.f32 %v629
        %v632 = vcvt.s32.f32 %v630
        %v633 = vmul.f32 %v625, %v631
        %v634 = vmul.f32 %v626, %v632
        %vm635 = vcmp.le.s32.totalorder %v619, 14
        %vm636 = vcmp.le.s32.totalorder %v620, 14
        %v637 = vsel %vm635, 1, 0
        %v638 = vsel %vm636, 1, 0
        %v639 = vcvt.s32.f32 %v637
        %v640 = vcvt.s32.f32 %v638
        %v641 = vmul.f32 %v625, %v639
        %v642 = vmul.f32 %v626, %v640
        %vm643 = vcmp.lt.s32.totalorder %v595, 240
        %vm644 = vcmp.lt.s32.totalorder %v596, 240
        %v645 = vsel %vm643, 1, 0
        %v646 = vsel %vm644, 1, 0
        %v647 = vcvt.s32.f32 %v645
        %v648 = vcvt.s32.f32 %v646
        %v649 = vmul.f32 %v647, %v631
        %v650 = vmul.f32 %v648, %v632
        %v651 = vmul.f32 %v647, %v639
        %v652 = vmul.f32 %v648, %v640
        %v653 = vld [vmem:[%s1] sm:$0xff]
        %v654 = vld [vmem:[%s1 + $0x8] sm:$0xff]
        %v655 = vld [vmem:[%s2] sm:$0xff]
        %v656 = vld [vmem:[%s2 + $0x8] sm:$0xff]
        %v657 = vadd.f32 %v590, %v591
        %658 = vadd.xlane.f32.xlu0 %v657
        %v659 = vpop.xlane.xlu0 %658
        %v660 = vadd.f32 %v592, %v593
        %661 = vadd.xlane.f32.xlu0 %v660
        %v662 = vpop.xlane.xlu0 %661
        %v663 = vadd.f32 %v659, %v662
        %v664 = vrot.slane %v663, 4
        %v665 = vadd.f32 %v663, %v664
        %v666 = vrot.slane %v665, 2
        %v667 = vadd.f32 %v665, %v666
        %v668 = vrot.slane %v667, 1
        %v669 = vadd.f32 %v667, %v668
        %v670 = vrcp.pop 4096.0
        %v671 = vmul.f32 %v669, %v670
        %v672 = vsub.f32 %v590, %v671
        %v673 = vsub.f32 %v591, %v671
        %v674 = vsub.f32 %v592, %v671
        %v675 = vsub.f32 %v593, %v671
        %v676 = vmul.f32 %v672, %v672
        %v677 = vmul.f32 %v673, %v673
        %v678 = vmul.f32 %v674, %v674
        %v679 = vmul.f32 %v675, %v675
        %v680 = vadd.f32 %v676, %v677
        %681 = vadd.xlane.f32.xlu0 %v680
        %v682 = vpop.xlane.xlu0 %681
        %v683 = vadd.f32 %v678, %v679
        %684 = vadd.xlane.f32.xlu0 %v683
        %v685 = vpop.xlane.xlu0 %684
        %v686 = vadd.f32 %v682, %v685
        %v687 = vrot.slane %v686, 4
        %v688 = vadd.f32 %v686, %v687
        %v689 = vrot.slane %v688, 2
        %v690 = vadd.f32 %v688, %v689
        %v691 = vrot.slane %v690, 1
        %v692 = vadd.f32 %v690, %v691
        %v693 = vmul.f32 %v692, %v670
        %v694 = vadd.f32 %v693, 1e-05
        %v695 = vrsqrt.pop %v694
        %v696 = vmul.f32 %v672, %v695
        %v697 = vmul.f32 %v673, %v695
        %v698 = vmul.f32 %v674, %v695
        %v699 = vmul.f32 %v675, %v695
        %701 = vset.pattern.permute.xlu0 0
        %702 = vperm.xlu0 %701, %v653
        %v703 = vpop.permute.xlu0 %702
        %706 = vset.pattern.permute.xlu0 0
        %707 = vperm.xlu0 %706, %v654
        %v708 = vpop.permute.xlu0 %707
        %v710 = vmul.f32 %v696, %v703
        %v711 = vmul.f32 %v697, %v703
        %v712 = vmul.f32 %v698, %v708
        %v713 = vmul.f32 %v699, %v708
        %715 = vset.pattern.permute.xlu0 0
        %716 = vperm.xlu0 %715, %v655
        %v717 = vpop.permute.xlu0 %716
        %720 = vset.pattern.permute.xlu0 0
        %721 = vperm.xlu0 %720, %v656
        %v722 = vpop.permute.xlu0 %721
        %v724 = vadd.f32 %v710, %v717
        %v725 = vadd.f32 %v711, %v717
        %v726 = vadd.f32 %v712, %v722
        %v727 = vadd.f32 %v713, %v722
        %v728 = vmax.f32 %v724, 0.0
        %v729 = vmax.f32 %v725, 0.0
        %v730 = vmax.f32 %v726, 0.0
        %v731 = vmax.f32 %v727, 0.0
        %v732 = vld [vmem:[%s3] sm:$0x3]
        %v733 = vpack.c.bf16 %v730, %v728
        %v734 = vpack.c.bf16 %v731, %v729
        %v735 = vld [vmem:[%s4] sm:$0xf]
        %737 = vset.pattern.permute.xlu0 0
        %738 = vperm.xlu0 %737, %v735
        %v739 = vpop.permute.xlu0 %738
        %vm741 = vcmask 130048
        %v743 = vsel %vm741, %v732, 0
        %745 = vmatprep.subr.bf16.mxu0 0
        %746 = vmatpush1.bf16.msra.mxu0 0
        %747 = vmatprep.subr.bf16.mxu0 0
        %748 = vmatpush1.bf16.msra.mxu0 0
        %749 = vmatprep.subr.bf16.mxu0 0
        %750 = vmatpush1.bf16.msra.mxu0 0
        %751 = vmatprep.subr.bf16.mxu0 0
        %752 = vmatpush1.bf16.msra.mxu0 0
        %753 = vmatprep.subr.bf16.mxu0 0
        %754 = vmatpush1.bf16.msra.mxu0 0
        %755 = vmatprep.subr.bf16.mxu0 0
        %756 = vmatpush1.bf16.msra.mxu0 0
        %757 = vmatprep.subr.bf16.mxu0 0
        %758 = vmatpush1.bf16.msra.mxu0 0
        %759 = vmatprep.subr.bf16.mxu0 %v734
        %760 = vmatpush1.bf16.msra.mxu0 %v733
        %761 = vmatprep.subr.bf16.mxu0 0
        %762 = vmatpush2.bf16.msra.mxu0 0
        %763 = vmatprep.subr.bf16.mxu0 0
        %764 = vmatpush2.bf16.msra.mxu0 0
        %765 = vmatprep.subr.bf16.mxu0 0
        %766 = vmatpush2.bf16.msra.mxu0 0
        %767 = vmatprep.subr.bf16.mxu0 0
        %768 = vmatpush2.bf16.msra.mxu0 0
        %769 = vmatprep.subr.bf16.mxu0 0
        %770 = vmatpush2.bf16.msra.mxu0 0
        %771 = vmatprep.subr.bf16.mxu0 0
        %772 = vmatpush2.bf16.msra.mxu0 0
        %773 = vmatprep.subr.bf16.mxu0 0
        %774 = vmatpush2.bf16.msra.mxu0 0
        %775 = vmatprep.subr.bf16.mxu0 0
        %776 = vmatpush2.bf16.msra.mxu0 0
        %777 = vmatprep.mubr.bf16.mxu0 0
        %778 = vmatmul.mubr.bf16.gmra.mxu0 %v743
        %v779 = vpop.f32.mrf.mxu0
        %v780 = vadd.f32 %v739, %v779
        %v781 = vpop.f32.mrf.mxu0
        %v782 = vadd.f32 %v739, %v781
        %v783 = vpop.f32.mrf.mxu0
        %v784 = vpop.f32.mrf.mxu0
        %785 = vdwg.mxu0
        %v786 = vld [vmem:[%s5] sm:$0xf]
        %v787 = vld [vmem:[%s6] sm:$0xf]
        %vm788 = vcmask 1043456
        %v789 = vsel %vm788, %v780, 0.0
        %v790 = vsel %vm788, %v782, 0.0
        %v791 = vadd.f32 %v789, %v790
        %792 = vadd.xlane.f32.xlu0 %v791
        %v793 = vpop.xlane.xlu0 %792
        %v794 = vsel %vm788, %v793, 0.0
        %v795 = vrot.slane %v794, 4
        %v796 = vadd.f32 %v794, %v795
        %v797 = vrot.slane %v796, 2
        %v798 = vadd.f32 %v796, %v797
        %v799 = vrot.slane %v798, 1
        %v800 = vadd.f32 %v798, %v799
        %v801 = vrcp.pop 1024.0
        %v802 = vmul.f32 %v800, %v801
        %v803 = vsub.f32 %v780, %v802
        %v804 = vsub.f32 %v782, %v802
        %v805 = vmul.f32 %v803, %v803
        %v806 = vmul.f32 %v804, %v804
        %v807 = vsel %vm788, %v805, 0.0
        %v808 = vsel %vm788, %v806, 0.0
        %v809 = vadd.f32 %v807, %v808
        %810 = vadd.xlane.f32.xlu0 %v809
        %v811 = vpop.xlane.xlu0 %810
        %v812 = vsel %vm788, %v811, 0.0
        %v813 = vrot.slane %v812, 4
        %v814 = vadd.f32 %v812, %v813
        %v815 = vrot.slane %v814, 2
        %v816 = vadd.f32 %v814, %v815
        %v817 = vrot.slane %v816, 1
        %v818 = vadd.f32 %v816, %v817
        %v819 = vmul.f32 %v818, %v801
        %v820 = vadd.f32 %v819, 1e-05
        %v821 = vrsqrt.pop %v820
        %v822 = vmul.f32 %v803, %v821
        %v823 = vmul.f32 %v804, %v821
        %825 = vset.pattern.permute.xlu0 0
        %826 = vperm.xlu0 %825, %v786
        %v827 = vpop.permute.xlu0 %826
        %v829 = vmul.f32 %v822, %v827
        %v830 = vmul.f32 %v823, %v827
        %832 = vset.pattern.permute.xlu0 0
        %833 = vperm.xlu0 %832, %v787
        %v834 = vpop.permute.xlu0 %833
        %v836 = vadd.f32 %v829, %v834
        %v837 = vadd.f32 %v830, %v834
        %v838 = vmax.f32 %v836, 0.0
        %v839 = vmax.f32 %v837, 0.0
        %v840 = vld [vmem:[%s7] sm:$0x3]
        %v841 = vld [vmem:[%s8] sm:$0xf]
        %843 = vrot.lane.b32.xlu0 %v839, 17
        %v844 = vpop.permute.xlu0 %843
        %847 = vrot.lane.b32.xlu0 %v838, 17
        %v848 = vpop.permute.xlu0 %847
        %vm849 = vcmask 138240
        %v850 = vsel %vm849, %v848, %v844
        %v853 = vsel %vm849, %v844, %v848
        %v854 = vmul.f32 %v853, %v633
        %v855 = vmul.f32 %v850, %v634
        %856 = vrot.lane.b32.xlu0 %v839, 16
        %v857 = vpop.permute.xlu0 %856
        %859 = vrot.lane.b32.xlu0 %v838, 16
        %v860 = vpop.permute.xlu0 %859
        %v861 = vsel %vm741, %v860, %v857
        %v864 = vsel %vm741, %v857, %v860
        %v865 = vmul.f32 %v864, %v625
        %v866 = vmul.f32 %v861, %v626
        %867 = vrot.lane.b32.xlu0 %v839, 15
        %v868 = vpop.permute.xlu0 %867
        %870 = vrot.lane.b32.xlu0 %v838, 15
        %v871 = vpop.permute.xlu0 %870
        %vm872 = vcmask 121856
        %v873 = vsel %vm872, %v871, %v868
        %v876 = vsel %vm872, %v868, %v871
        %v877 = vmul.f32 %v876, %v641
        %v878 = vmul.f32 %v873, %v642
        %879 = vrot.lane.b32.xlu0 %v839, 1
        %v880 = vpop.permute.xlu0 %879
        %882 = vrot.lane.b32.xlu0 %v838, 1
        %v883 = vpop.permute.xlu0 %882
        %vm884 = vcmask 7168
        %v885 = vsel %vm884, %v883, %v880
        %v888 = vsel %vm884, %v880, %v883
        %v889 = vmul.f32 %v888, %v631
        %v890 = vmul.f32 %v885, %v632
        %891 = vrot.lane.b32.xlu0 %v838, 127
        %v892 = vpop.permute.xlu0 %891
        %893 = vrot.lane.b32.xlu0 %v839, 127
        %v894 = vpop.permute.xlu0 %893
        %vm895 = vcmask 1039360
        %v896 = vsel %vm895, %v892, %v894
        %v900 = vsel %vm895, %v894, %v892
        %v901 = vmul.f32 %v896, %v639
        %v902 = vmul.f32 %v900, %v640
        %903 = vrot.lane.b32.xlu0 %v838, 113
        %v904 = vpop.permute.xlu0 %903
        %905 = vrot.lane.b32.xlu0 %v839, 113
        %v906 = vpop.permute.xlu0 %905
        %vm907 = vcmask 924672
        %v908 = vsel %vm907, %v904, %v906
        %v912 = vsel %vm907, %v906, %v904
        %v913 = vmul.f32 %v908, %v649
        %v914 = vmul.f32 %v912, %v650
        %915 = vrot.lane.b32.xlu0 %v838, 112
        %v916 = vpop.permute.xlu0 %915
        %917 = vrot.lane.b32.xlu0 %v839, 112
        %v918 = vpop.permute.xlu0 %917
        %vm919 = vcmask 916480
        %v920 = vsel %vm919, %v916, %v918
        %v924 = vsel %vm919, %v918, %v916
        %v925 = vmul.f32 %v920, %v647
        %v926 = vmul.f32 %v924, %v648
        %927 = vrot.lane.b32.xlu0 %v838, 111
        %v928 = vpop.permute.xlu0 %927
        %929 = vrot.lane.b32.xlu0 %v839, 111
        %v930 = vpop.permute.xlu0 %929
        %vm931 = vcmask 908288
        %v932 = vsel %vm931, %v928, %v930
        %v936 = vsel %vm931, %v930, %v928
        %v937 = vmul.f32 %v932, %v651
        %v938 = vmul.f32 %v936, %v652
        %v941 = vrot.slane %v865, 4
        %v942 = vrot.slane %v866, 4
        %v947 = vrot.slane %v889, 4
        %v948 = vrot.slane %v890, 4
        %v953 = vrot.slane %v901, 4
        %v954 = vrot.slane %v902, 4
        %v959 = vrot.slane %v925, 4
        %v960 = vrot.slane %v926, 4
        %v963 = vsel %vm788, %v854, %v941
        %v964 = vsel %vm788, %v855, %v942
        %v965 = vsel %vm788, %v877, %v947
        %v966 = vsel %vm788, %v878, %v948
        %v967 = vsel %vm788, %v838, %v953
        %v968 = vsel %vm788, %v839, %v954
        %v969 = vsel %vm788, %v913, %v959
        %v970 = vsel %vm788, %v914, %v960
        %v971 = vpack.c.bf16 %v965, %v963
        %v972 = vpack.c.bf16 %v966, %v964
        %v973 = vpack.c.bf16 %v969, %v967
        %v974 = vpack.c.bf16 %v970, %v968
        %v975 = vpack.c.bf16 %v937, %v937
        %v976 = vpack.c.bf16 %v938, %v938
        %978 = vset.pattern.permute.xlu0 0
        %979 = vperm.xlu0 %978, %v841
        %v980 = vpop.permute.xlu0 %979
        %vm982 = vcmask 293888
        %v984 = vsel %vm982, %v840, 0
        %vm986 = vcmask 1041408
        %v988 = vsel %vm986, %v975, 0
        %v991 = vsel %vm986, %v976, 0
        %993 = vmatprep.subr.bf16.mxu0 0
        %994 = vmatpush1.bf16.msra.mxu0 0
        %995 = vmatprep.subr.bf16.mxu0 0
        %996 = vmatpush1.bf16.msra.mxu0 0
        %997 = vmatprep.subr.bf16.mxu0 0
        %998 = vmatpush1.bf16.msra.mxu0 0
        %999 = vmatprep.subr.bf16.mxu0 0
        %1000 = vmatpush1.bf16.msra.mxu0 0
        %1001 = vmatprep.subr.bf16.mxu0 0
        %1002 = vmatpush1.bf16.msra.mxu0 0
        %1003 = vmatprep.subr.bf16.mxu0 %v991
        %1004 = vmatpush1.bf16.msra.mxu0 %v988
        %1005 = vmatprep.subr.bf16.mxu0 %v974
        %1006 = vmatpush1.bf16.msra.mxu0 %v973
        %1007 = vmatprep.subr.bf16.mxu0 %v972
        %1008 = vmatpush1.bf16.msra.mxu0 %v971
        %1009 = vmatprep.subr.bf16.mxu0 0
        %1010 = vmatpush2.bf16.msra.mxu0 0
        %1011 = vmatprep.subr.bf16.mxu0 0
        %1012 = vmatpush2.bf16.msra.mxu0 0
        %1013 = vmatprep.subr.bf16.mxu0 0
        %1014 = vmatpush2.bf16.msra.mxu0 0
        %1015 = vmatprep.subr.bf16.mxu0 0
        %1016 = vmatpush2.bf16.msra.mxu0 0
        %1017 = vmatprep.subr.bf16.mxu0 0
        %1018 = vmatpush2.bf16.msra.mxu0 0
        %1019 = vmatprep.subr.bf16.mxu0 0
        %1020 = vmatpush2.bf16.msra.mxu0 0
        %1021 = vmatprep.subr.bf16.mxu0 0
        %1022 = vmatpush2.bf16.msra.mxu0 0
        %1023 = vmatprep.subr.bf16.mxu0 0
        %1024 = vmatpush2.bf16.msra.mxu0 0
        %1025 = vmatprep.mubr.bf16.mxu0 0
        %1026 = vmatmul.mubr.bf16.gmra.mxu0 %v984
        %v1027 = vpop.f32.mrf.mxu0
        %v1028 = vadd.f32 %v980, %v1027
        %v1029 = vpop.f32.mrf.mxu0
        %v1030 = vadd.f32 %v980, %v1029
        %v1031 = vpop.f32.mrf.mxu0
        %v1032 = vpop.f32.mrf.mxu0
        %1033 = vdwg.mxu0
        %v1034 = vld [vmem:[%s9] sm:$0xf]
        %v1035 = vld [vmem:[%s10] sm:$0xf]
        %v1036 = vsel %vm788, %v1028, 0.0
        %v1037 = vsel %vm788, %v1030, 0.0
        %v1038 = vadd.f32 %v1036, %v1037
        %1039 = vadd.xlane.f32.xlu0 %v1038
        %v1040 = vpop.xlane.xlu0 %1039
        %v1041 = vsel %vm788, %v1040, 0.0
        %v1042 = vrot.slane %v1041, 4
        %v1043 = vadd.f32 %v1041, %v1042
        %v1044 = vrot.slane %v1043, 2
        %v1045 = vadd.f32 %v1043, %v1044
        %v1046 = vrot.slane %v1045, 1
        %v1047 = vadd.f32 %v1045, %v1046
        %v1048 = vmul.f32 %v1047, %v801
        %v1049 = vsub.f32 %v1028, %v1048
        %v1050 = vsub.f32 %v1030, %v1048
        %v1051 = vmul.f32 %v1049, %v1049
        %v1052 = vmul.f32 %v1050, %v1050
        %v1053 = vsel %vm788, %v1051, 0.0
        %v1054 = vsel %vm788, %v1052, 0.0
        %v1055 = vadd.f32 %v1053, %v1054
        %1056 = vadd.xlane.f32.xlu0 %v1055
        %v1057 = vpop.xlane.xlu0 %1056
        %v1058 = vsel %vm788, %v1057, 0.0
        %v1059 = vrot.slane %v1058, 4
        %v1060 = vadd.f32 %v1058, %v1059
        %v1061 = vrot.slane %v1060, 2
        %v1062 = vadd.f32 %v1060, %v1061
        %v1063 = vrot.slane %v1062, 1
        %v1064 = vadd.f32 %v1062, %v1063
        %v1065 = vmul.f32 %v1064, %v801
        %v1066 = vadd.f32 %v1065, 1e-05
        %v1067 = vrsqrt.pop %v1066
        %v1068 = vmul.f32 %v1049, %v1067
        %v1069 = vmul.f32 %v1050, %v1067
        %1071 = vset.pattern.permute.xlu0 0
        %1072 = vperm.xlu0 %1071, %v1034
        %v1073 = vpop.permute.xlu0 %1072
        %v1075 = vmul.f32 %v1068, %v1073
        %v1076 = vmul.f32 %v1069, %v1073
        %1078 = vset.pattern.permute.xlu0 0
        %1079 = vperm.xlu0 %1078, %v1035
        %v1080 = vpop.permute.xlu0 %1079
        %v1082 = vadd.f32 %v1075, %v1080
        %v1083 = vadd.f32 %v1076, %v1080
        %v1084 = vmax.f32 %v1082, 0.0
        %v1085 = vmax.f32 %v1083, 0.0
        %v1086 = vld [vmem:[%s11] sm:$0x3]
        %v1087 = vld [vmem:[%s12] sm:$0xf]
        %1089 = vrot.lane.b32.xlu0 %v1085, 17
        %v1090 = vpop.permute.xlu0 %1089
        %1093 = vrot.lane.b32.xlu0 %v1084, 17
        %v1094 = vpop.permute.xlu0 %1093
        %v1095 = vsel %vm849, %v1094, %v1090
        %v1098 = vsel %vm849, %v1090, %v1094
        %v1099 = vmul.f32 %v1098, %v633
        %v1100 = vmul.f32 %v1095, %v634
        %1101 = vrot.lane.b32.xlu0 %v1085, 16
        %v1102 = vpop.permute.xlu0 %1101
        %1104 = vrot.lane.b32.xlu0 %v1084, 16
        %v1105 = vpop.permute.xlu0 %1104
        %v1106 = vsel %vm741, %v1105, %v1102
        %v1109 = vsel %vm741, %v1102, %v1105
        %v1110 = vmul.f32 %v1109, %v625
        %v1111 = vmul.f32 %v1106, %v626
        %1112 = vrot.lane.b32.xlu0 %v1085, 15
        %v1113 = vpop.permute.xlu0 %1112
        %1115 = vrot.lane.b32.xlu0 %v1084, 15
        %v1116 = vpop.permute.xlu0 %1115
        %v1117 = vsel %vm872, %v1116, %v1113
        %v1120 = vsel %vm872, %v1113, %v1116
        %v1121 = vmul.f32 %v1120, %v641
        %v1122 = vmul.f32 %v1117, %v642
        %1123 = vrot.lane.b32.xlu0 %v1085, 1
        %v1124 = vpop.permute.xlu0 %1123
        %1126 = vrot.lane.b32.xlu0 %v1084, 1
        %v1127 = vpop.permute.xlu0 %1126
        %v1128 = vsel %vm884, %v1127, %v1124
        %v1131 = vsel %vm884, %v1124, %v1127
        %v1132 = vmul.f32 %v1131, %v631
        %v1133 = vmul.f32 %v1128, %v632
        %1134 = vrot.lane.b32.xlu0 %v1084, 127
        %v1135 = vpop.permute.xlu0 %1134
        %1136 = vrot.lane.b32.xlu0 %v1085, 127
        %v1137 = vpop.permute.xlu0 %1136
        %v1138 = vsel %vm895, %v1135, %v1137
        %v1142 = vsel %vm895, %v1137, %v1135
        %v1143 = vmul.f32 %v1138, %v639
        %v1144 = vmul.f32 %v1142, %v640
        %1145 = vrot.lane.b32.xlu0 %v1084, 113
        %v1146 = vpop.permute.xlu0 %1145
        %1147 = vrot.lane.b32.xlu0 %v1085, 113
        %v1148 = vpop.permute.xlu0 %1147
        %v1149 = vsel %vm907, %v1146, %v1148
        %v1153 = vsel %vm907, %v1148, %v1146
        %v1154 = vmul.f32 %v1149, %v649
        %v1155 = vmul.f32 %v1153, %v650
        %1156 = vrot.lane.b32.xlu0 %v1084, 112
        %v1157 = vpop.permute.xlu0 %1156
        %1158 = vrot.lane.b32.xlu0 %v1085, 112
        %v1159 = vpop.permute.xlu0 %1158
        %v1160 = vsel %vm919, %v1157, %v1159
        %v1164 = vsel %vm919, %v1159, %v1157
        %v1165 = vmul.f32 %v1160, %v647
        %v1166 = vmul.f32 %v1164, %v648
        %1167 = vrot.lane.b32.xlu0 %v1084, 111
        %v1168 = vpop.permute.xlu0 %1167
        %1169 = vrot.lane.b32.xlu0 %v1085, 111
        %v1170 = vpop.permute.xlu0 %1169
        %v1171 = vsel %vm931, %v1168, %v1170
        %v1175 = vsel %vm931, %v1170, %v1168
        %v1176 = vmul.f32 %v1171, %v651
        %v1177 = vmul.f32 %v1175, %v652
        %v1180 = vrot.slane %v1110, 4
        %v1181 = vrot.slane %v1111, 4
        %v1186 = vrot.slane %v1132, 4
        %v1187 = vrot.slane %v1133, 4
        %v1192 = vrot.slane %v1143, 4
        %v1193 = vrot.slane %v1144, 4
        %v1198 = vrot.slane %v1165, 4
        %v1199 = vrot.slane %v1166, 4
        %v1202 = vsel %vm788, %v1099, %v1180
        %v1203 = vsel %vm788, %v1100, %v1181
        %v1204 = vsel %vm788, %v1121, %v1186
        %v1205 = vsel %vm788, %v1122, %v1187
        %v1206 = vsel %vm788, %v1084, %v1192
        %v1207 = vsel %vm788, %v1085, %v1193
        %v1208 = vsel %vm788, %v1154, %v1198
        %v1209 = vsel %vm788, %v1155, %v1199
        %v1210 = vpack.c.bf16 %v1204, %v1202
        %v1211 = vpack.c.bf16 %v1205, %v1203
        %v1212 = vpack.c.bf16 %v1208, %v1206
        %v1213 = vpack.c.bf16 %v1209, %v1207
        %v1214 = vpack.c.bf16 %v1176, %v1176
        %v1215 = vpack.c.bf16 %v1177, %v1177
        %1217 = vset.pattern.permute.xlu0 0
        %1218 = vperm.xlu0 %1217, %v1087
        %v1219 = vpop.permute.xlu0 %1218
        %v1222 = vsel %vm982, %v1086, 0
        %v1225 = vsel %vm986, %v1214, 0
        %v1228 = vsel %vm986, %v1215, 0
        %1230 = vmatprep.subr.bf16.mxu0 0
        %1231 = vmatpush1.bf16.msra.mxu0 0
        %1232 = vmatprep.subr.bf16.mxu0 0
        %1233 = vmatpush1.bf16.msra.mxu0 0
        %1234 = vmatprep.subr.bf16.mxu0 0
        %1235 = vmatpush1.bf16.msra.mxu0 0
        %1236 = vmatprep.subr.bf16.mxu0 0
        %1237 = vmatpush1.bf16.msra.mxu0 0
        %1238 = vmatprep.subr.bf16.mxu0 0
        %1239 = vmatpush1.bf16.msra.mxu0 0
        %1240 = vmatprep.subr.bf16.mxu0 %v1228
        %1241 = vmatpush1.bf16.msra.mxu0 %v1225
        %1242 = vmatprep.subr.bf16.mxu0 %v1213
        %1243 = vmatpush1.bf16.msra.mxu0 %v1212
        %1244 = vmatprep.subr.bf16.mxu0 %v1211
        %1245 = vmatpush1.bf16.msra.mxu0 %v1210
        %1246 = vmatprep.subr.bf16.mxu0 0
        %1247 = vmatpush2.bf16.msra.mxu0 0
        %1248 = vmatprep.subr.bf16.mxu0 0
        %1249 = vmatpush2.bf16.msra.mxu0 0
        %1250 = vmatprep.subr.bf16.mxu0 0
        %1251 = vmatpush2.bf16.msra.mxu0 0
        %1252 = vmatprep.subr.bf16.mxu0 0
        %1253 = vmatpush2.bf16.msra.mxu0 0
        %1254 = vmatprep.subr.bf16.mxu0 0
        %1255 = vmatpush2.bf16.msra.mxu0 0
        %1256 = vmatprep.subr.bf16.mxu0 0
        %1257 = vmatpush2.bf16.msra.mxu0 0
        %1258 = vmatprep.subr.bf16.mxu0 0
        %1259 = vmatpush2.bf16.msra.mxu0 0
        %1260 = vmatprep.subr.bf16.mxu0 0
        %1261 = vmatpush2.bf16.msra.mxu0 0
        %1262 = vmatprep.mubr.bf16.mxu0 0
        %1263 = vmatmul.mubr.bf16.gmra.mxu0 %v1222
        %v1264 = vpop.f32.mrf.mxu0
        %v1265 = vadd.f32 %v1219, %v1264
        %v1266 = vpop.f32.mrf.mxu0
        %v1267 = vadd.f32 %v1219, %v1266
        %v1268 = vpop.f32.mrf.mxu0
        %v1269 = vpop.f32.mrf.mxu0
        %1270 = vdwg.mxu0
        %v1271 = vld [vmem:[%s13] sm:$0xf]
        %v1272 = vld [vmem:[%s14] sm:$0xf]
        %v1273 = vsel %vm788, %v1265, 0.0
        %v1274 = vsel %vm788, %v1267, 0.0
        %v1275 = vadd.f32 %v1273, %v1274
        %1276 = vadd.xlane.f32.xlu0 %v1275
        %v1277 = vpop.xlane.xlu0 %1276
        %v1278 = vsel %vm788, %v1277, 0.0
        %v1279 = vrot.slane %v1278, 4
        %v1280 = vadd.f32 %v1278, %v1279
        %v1281 = vrot.slane %v1280, 2
        %v1282 = vadd.f32 %v1280, %v1281
        %v1283 = vrot.slane %v1282, 1
        %v1284 = vadd.f32 %v1282, %v1283
        %v1285 = vmul.f32 %v1284, %v801
        %v1286 = vsub.f32 %v1265, %v1285
        %v1287 = vsub.f32 %v1267, %v1285
        %v1288 = vmul.f32 %v1286, %v1286
        %v1289 = vmul.f32 %v1287, %v1287
        %v1290 = vsel %vm788, %v1288, 0.0
        %v1291 = vsel %vm788, %v1289, 0.0
        %v1292 = vadd.f32 %v1290, %v1291
        %1293 = vadd.xlane.f32.xlu0 %v1292
        %v1294 = vpop.xlane.xlu0 %1293
        %v1295 = vsel %vm788, %v1294, 0.0
        %v1296 = vrot.slane %v1295, 4
        %v1297 = vadd.f32 %v1295, %v1296
        %v1298 = vrot.slane %v1297, 2
        %v1299 = vadd.f32 %v1297, %v1298
        %v1300 = vrot.slane %v1299, 1
        %v1301 = vadd.f32 %v1299, %v1300
        %v1302 = vmul.f32 %v1301, %v801
        %v1303 = vadd.f32 %v1302, 1e-05
        %v1304 = vrsqrt.pop %v1303
        %v1305 = vmul.f32 %v1286, %v1304
        %v1306 = vmul.f32 %v1287, %v1304
        %1308 = vset.pattern.permute.xlu0 0
        %1309 = vperm.xlu0 %1308, %v1271
        %v1310 = vpop.permute.xlu0 %1309
        %v1312 = vmul.f32 %v1305, %v1310
        %v1313 = vmul.f32 %v1306, %v1310
        %1315 = vset.pattern.permute.xlu0 0
        %1316 = vperm.xlu0 %1315, %v1272
        %v1317 = vpop.permute.xlu0 %1316
        %v1319 = vadd.f32 %v1312, %v1317
        %v1320 = vadd.f32 %v1313, %v1317
        %v1321 = vmax.f32 %v1319, 0.0
        %v1322 = vmax.f32 %v1320, 0.0
        %v1323 = vld [vmem:[%s15] sm:$0xf]
        %v1324 = vpack.c.bf16 %v1321, %v1321
        %v1325 = vpack.c.bf16 %v1322, %v1322
        %v1326 = vld [vmem:[%s16] sm:$0xff]
        %1328 = vset.pattern.permute.xlu0 0
        %1329 = vperm.xlu0 %1328, %v1326
        %v1330 = vpop.permute.xlu0 %1329
        %vm1332 = vcmask 31744
        %v1334 = vsel %vm1332, %v1323, 0
        %v1337 = vsel %vm986, %v1324, 0
        %v1340 = vsel %vm986, %v1325, 0
        %1342 = vmatprep.subr.bf16.mxu0 0
        %1343 = vmatpush1.bf16.msra.mxu0 0
        %1344 = vmatprep.subr.bf16.mxu0 0
        %1345 = vmatpush1.bf16.msra.mxu0 0
        %1346 = vmatprep.subr.bf16.mxu0 0
        %1347 = vmatpush1.bf16.msra.mxu0 0
        %1348 = vmatprep.subr.bf16.mxu0 0
        %1349 = vmatpush1.bf16.msra.mxu0 0
        %1350 = vmatprep.subr.bf16.mxu0 0
        %1351 = vmatpush1.bf16.msra.mxu0 0
        %1352 = vmatprep.subr.bf16.mxu0 0
        %1353 = vmatpush1.bf16.msra.mxu0 0
        %1354 = vmatprep.subr.bf16.mxu0 0
        %1355 = vmatpush1.bf16.msra.mxu0 0
        %1356 = vmatprep.subr.bf16.mxu0 %v1340
        %1357 = vmatpush1.bf16.msra.mxu0 %v1337
        %1358 = vmatprep.subr.bf16.mxu0 0
        %1359 = vmatpush2.bf16.msra.mxu0 0
        %1360 = vmatprep.subr.bf16.mxu0 0
        %1361 = vmatpush2.bf16.msra.mxu0 0
        %1362 = vmatprep.subr.bf16.mxu0 0
        %1363 = vmatpush2.bf16.msra.mxu0 0
        %1364 = vmatprep.subr.bf16.mxu0 0
        %1365 = vmatpush2.bf16.msra.mxu0 0
        %1366 = vmatprep.subr.bf16.mxu0 0
        %1367 = vmatpush2.bf16.msra.mxu0 0
        %1368 = vmatprep.subr.bf16.mxu0 0
        %1369 = vmatpush2.bf16.msra.mxu0 0
        %1370 = vmatprep.subr.bf16.mxu0 0
        %1371 = vmatpush2.bf16.msra.mxu0 0
        %1372 = vmatprep.subr.bf16.mxu0 0
        %1373 = vmatpush2.bf16.msra.mxu0 0
        %1374 = vmatprep.mubr.bf16.mxu0 0
        %1375 = vmatmul.mubr.bf16.gmra.mxu0 %v1334
        %v1376 = vpop.f32.mrf.mxu0
        %v1377 = vadd.f32 %v1330, %v1376
        %v1378 = vpop.f32.mrf.mxu0
        %v1379 = vadd.f32 %v1330, %v1378
        %v1380 = vpop.f32.mrf.mxu0
        %v1381 = vpop.f32.mrf.mxu0
        %1382 = vdwg.mxu0
        %v1383 = vadd.f32 %v1377, %v728
        %v1384 = vadd.f32 %v1379, %v729
        %v1385 = vld [vmem:[#allocation2] sm:$0xff]
        %v1386 = vld [vmem:[#allocation2 + $0x8] sm:$0xff]
        %v1387 = vld [vmem:[#allocation2 + $0x10] sm:$0xff]
        %v1388 = vld [vmem:[#allocation2 + $0x18] sm:$0xff]
        %v1389 = vld [vmem:[#allocation2 + $0x20] sm:$0xff]
        %v1390 = vld [vmem:[#allocation2 + $0x28] sm:$0xff]
        %v1391 = vld [vmem:[#allocation2 + $0x30] sm:$0xff]
        %v1392 = vld [vmem:[#allocation2 + $0x38] sm:$0xff]
        %v1393 = vld [vmem:[#allocation2 + $0x40] sm:$0xff]
        %v1394 = vld [vmem:[#allocation2 + $0x48] sm:$0xff]
        %v1395 = vld [vmem:[#allocation2 + $0x50] sm:$0xff]
        %v1396 = vld [vmem:[#allocation2 + $0x58] sm:$0xff]
        %v1397 = vld [vmem:[#allocation2 + $0x60] sm:$0xff]
        %v1398 = vld [vmem:[#allocation2 + $0x68] sm:$0xff]
        %v1399 = vld [vmem:[#allocation2 + $0x70] sm:$0xff]
        %v1400 = vld [vmem:[#allocation2 + $0x78] sm:$0xff]
        %v1401 = vld [vmem:[#allocation2 + $0x80] sm:$0xff]
        %v1402 = vld [vmem:[#allocation2 + $0x88] sm:$0xff]
        %v1403 = vld [vmem:[#allocation2 + $0x90] sm:$0xff]
        %v1404 = vld [vmem:[#allocation2 + $0x98] sm:$0xff]
        %v1405 = vld [vmem:[#allocation2 + $0xa0] sm:$0xff]
        %v1406 = vld [vmem:[#allocation2 + $0xa8] sm:$0xff]
        %v1407 = vld [vmem:[#allocation2 + $0xb0] sm:$0xff]
        %v1408 = vld [vmem:[#allocation2 + $0xb8] sm:$0xff]
        %v1409 = vld [vmem:[#allocation2 + $0xc0] sm:$0xff]
        %v1410 = vld [vmem:[#allocation2 + $0xc8] sm:$0xff]
        %v1411 = vld [vmem:[#allocation2 + $0xd0] sm:$0xff]
        %v1412 = vld [vmem:[#allocation2 + $0xd8] sm:$0xff]
        %v1413 = vld [vmem:[#allocation2 + $0xe0] sm:$0xff]
        %v1414 = vld [vmem:[#allocation2 + $0xe8] sm:$0xff]
        %v1415 = vld [vmem:[#allocation2 + $0xf0] sm:$0xff]
        %v1416 = vld [vmem:[#allocation2 + $0xf8] sm:$0xff]
        %v1417 = vld [vmem:[#allocation2 + $0x100] sm:$0xff]
        %v1418 = vld [vmem:[#allocation2 + $0x108] sm:$0xff]
        %v1419 = vld [vmem:[#allocation2 + $0x110] sm:$0xff]
        %v1420 = vld [vmem:[#allocation2 + $0x118] sm:$0xff]
        %v1421 = vld [vmem:[#allocation2 + $0x120] sm:$0xff]
        %v1422 = vld [vmem:[#allocation2 + $0x128] sm:$0xff]
        %v1423 = vld [vmem:[#allocation2 + $0x130] sm:$0xff]
        %v1424 = vld [vmem:[#allocation2 + $0x138] sm:$0xff]
        %v1425 = vld [vmem:[#allocation2 + $0x140] sm:$0xff]
        %v1426 = vld [vmem:[#allocation2 + $0x148] sm:$0xff]
        %v1427 = vld [vmem:[#allocation2 + $0x150] sm:$0xff]
        %v1428 = vld [vmem:[#allocation2 + $0x158] sm:$0xff]
        %v1429 = vld [vmem:[#allocation2 + $0x160] sm:$0xff]
        %v1430 = vld [vmem:[#allocation2 + $0x168] sm:$0xff]
        %v1431 = vld [vmem:[#allocation2 + $0x170] sm:$0xff]
        %v1432 = vld [vmem:[#allocation2 + $0x178] sm:$0xff]
        %v1433 = vld [vmem:[#allocation2 + $0x180] sm:$0xff]
        %v1434 = vld [vmem:[#allocation2 + $0x188] sm:$0xff]
        %v1435 = vld [vmem:[#allocation2 + $0x190] sm:$0xff]
        %v1436 = vld [vmem:[#allocation2 + $0x198] sm:$0xff]
        %v1437 = vld [vmem:[#allocation2 + $0x1a0] sm:$0xff]
        %v1438 = vld [vmem:[#allocation2 + $0x1a8] sm:$0xff]
        %v1439 = vld [vmem:[#allocation2 + $0x1b0] sm:$0xff]
        %v1440 = vld [vmem:[#allocation2 + $0x1b8] sm:$0xff]
        %v1441 = vld [vmem:[#allocation2 + $0x1c0] sm:$0xff]
        %v1442 = vld [vmem:[#allocation2 + $0x1c8] sm:$0xff]
        %v1443 = vld [vmem:[#allocation2 + $0x1d0] sm:$0xff]
        %v1444 = vld [vmem:[#allocation2 + $0x1d8] sm:$0xff]
        %v1445 = vld [vmem:[#allocation2 + $0x1e0] sm:$0xff]
        %v1446 = vld [vmem:[#allocation2 + $0x1e8] sm:$0xff]
        %v1447 = vld [vmem:[#allocation2 + $0x1f0] sm:$0xff]
        %v1448 = vld [vmem:[#allocation2 + $0x1f8] sm:$0xff]
        %v1449 = vld [vmem:[#allocation2 + $0x200] sm:$0xff]
        %v1450 = vld [vmem:[#allocation2 + $0x208] sm:$0xff]
        %v1451 = vld [vmem:[#allocation2 + $0x210] sm:$0xff]
        %v1452 = vld [vmem:[#allocation2 + $0x218] sm:$0xff]
        %v1453 = vld [vmem:[#allocation2 + $0x220] sm:$0xff]
        %v1454 = vld [vmem:[#allocation2 + $0x228] sm:$0xff]
        %v1455 = vld [vmem:[#allocation2 + $0x230] sm:$0xff]
        %v1456 = vld [vmem:[#allocation2 + $0x238] sm:$0xff]
        %v1457 = vld [vmem:[#allocation2 + $0x240] sm:$0xff]
        %v1458 = vld [vmem:[#allocation2 + $0x248] sm:$0xff]
        %v1459 = vld [vmem:[#allocation2 + $0x250] sm:$0xff]
        %v1460 = vld [vmem:[#allocation2 + $0x258] sm:$0xff]
        %v1461 = vld [vmem:[#allocation2 + $0x260] sm:$0xff]
        %v1462 = vld [vmem:[#allocation2 + $0x268] sm:$0xff]
        %v1463 = vld [vmem:[#allocation2 + $0x270] sm:$0xff]
        %v1464 = vld [vmem:[#allocation2 + $0x278] sm:$0xff]
        %v1465 = vld [vmem:[#allocation2 + $0x280] sm:$0xff]
        %v1466 = vld [vmem:[#allocation2 + $0x288] sm:$0xff]
        %v1467 = vld [vmem:[#allocation2 + $0x290] sm:$0xff]
        %v1468 = vld [vmem:[#allocation2 + $0x298] sm:$0xff]
        %v1469 = vld [vmem:[#allocation2 + $0x2a0] sm:$0xff]
        %v1470 = vld [vmem:[#allocation2 + $0x2a8] sm:$0xff]
        %v1471 = vld [vmem:[#allocation2 + $0x2b0] sm:$0xff]
        %v1472 = vld [vmem:[#allocation2 + $0x2b8] sm:$0xff]
        %v1473 = vld [vmem:[#allocation2 + $0x2c0] sm:$0xff]
        %v1474 = vld [vmem:[#allocation2 + $0x2c8] sm:$0xff]
        %v1475 = vld [vmem:[#allocation2 + $0x2d0] sm:$0xff]
        %v1476 = vld [vmem:[#allocation2 + $0x2d8] sm:$0xff]
        %v1477 = vld [vmem:[#allocation2 + $0x2e0] sm:$0xff]
        %v1478 = vld [vmem:[#allocation2 + $0x2e8] sm:$0xff]
        %v1479 = vld [vmem:[#allocation2 + $0x2f0] sm:$0xff]
        %v1480 = vld [vmem:[#allocation2 + $0x2f8] sm:$0xff]
        %v1481 = vld [vmem:[#allocation2 + $0x300] sm:$0xff]
        %v1482 = vld [vmem:[#allocation2 + $0x308] sm:$0xff]
        %v1483 = vld [vmem:[#allocation2 + $0x310] sm:$0xff]
        %v1484 = vld [vmem:[#allocation2 + $0x318] sm:$0xff]
        %v1485 = vld [vmem:[#allocation2 + $0x320] sm:$0xff]
        %v1486 = vld [vmem:[#allocation2 + $0x328] sm:$0xff]
        %v1487 = vld [vmem:[#allocation2 + $0x330] sm:$0xff]
        %v1488 = vld [vmem:[#allocation2 + $0x338] sm:$0xff]
        %v1489 = vld [vmem:[#allocation2 + $0x340] sm:$0xff]
        %v1490 = vld [vmem:[#allocation2 + $0x348] sm:$0xff]
        %v1491 = vld [vmem:[#allocation2 + $0x350] sm:$0xff]
        %v1492 = vld [vmem:[#allocation2 + $0x358] sm:$0xff]
        %v1493 = vld [vmem:[#allocation2 + $0x360] sm:$0xff]
        %v1494 = vld [vmem:[#allocation2 + $0x368] sm:$0xff]
        %v1495 = vld [vmem:[#allocation2 + $0x370] sm:$0xff]
        %v1496 = vld [vmem:[#allocation2 + $0x378] sm:$0xff]
        %v1497 = vld [vmem:[#allocation2 + $0x380] sm:$0xff]
        %v1498 = vld [vmem:[#allocation2 + $0x388] sm:$0xff]
        %v1499 = vld [vmem:[#allocation2 + $0x390] sm:$0xff]
        %v1500 = vld [vmem:[#allocation2 + $0x398] sm:$0xff]
        %v1501 = vld [vmem:[#allocation2 + $0x3a0] sm:$0xff]
        %v1502 = vld [vmem:[#allocation2 + $0x3a8] sm:$0xff]
        %v1503 = vld [vmem:[#allocation2 + $0x3b0] sm:$0xff]
        %v1504 = vld [vmem:[#allocation2 + $0x3b8] sm:$0xff]
        %v1505 = vld [vmem:[#allocation2 + $0x3c0] sm:$0xff]
        %v1506 = vld [vmem:[#allocation2 + $0x3c8] sm:$0xff]
        %v1507 = vld [vmem:[#allocation2 + $0x3d0] sm:$0xff]
        %v1508 = vld [vmem:[#allocation2 + $0x3d8] sm:$0xff]
        %v1509 = vld [vmem:[#allocation2 + $0x3e0] sm:$0xff]
        %v1510 = vld [vmem:[#allocation2 + $0x3e8] sm:$0xff]
        %v1511 = vld [vmem:[#allocation2 + $0x3f0] sm:$0xff]
        %v1512 = vld [vmem:[#allocation2 + $0x3f8] sm:$0xff]
        %v1513 = vld [vmem:[#allocation2 + $0x400] sm:$0xff]
        %v1514 = vld [vmem:[#allocation2 + $0x408] sm:$0xff]
        %v1515 = vld [vmem:[#allocation2 + $0x410] sm:$0xff]
        %v1516 = vld [vmem:[#allocation2 + $0x418] sm:$0xff]
        %v1517 = vld [vmem:[#allocation2 + $0x420] sm:$0xff]
        %v1518 = vld [vmem:[#allocation2 + $0x428] sm:$0xff]
        %v1519 = vld [vmem:[#allocation2 + $0x430] sm:$0xff]
        %v1520 = vld [vmem:[#allocation2 + $0x438] sm:$0xff]
        %v1521 = vld [vmem:[#allocation2 + $0x440] sm:$0xff]
        %v1522 = vld [vmem:[#allocation2 + $0x448] sm:$0xff]
        %v1523 = vld [vmem:[#allocation2 + $0x450] sm:$0xff]
        %v1524 = vld [vmem:[#allocation2 + $0x458] sm:$0xff]
        %v1525 = vld [vmem:[#allocation2 + $0x460] sm:$0xff]
        %v1526 = vld [vmem:[#allocation2 + $0x468] sm:$0xff]
        %v1527 = vld [vmem:[#allocation2 + $0x470] sm:$0xff]
        %v1528 = vld [vmem:[#allocation2 + $0x478] sm:$0xff]
        %v1529 = vld [vmem:[#allocation2 + $0x480] sm:$0xff]
        %v1530 = vld [vmem:[#allocation2 + $0x488] sm:$0xff]
        %v1531 = vld [vmem:[#allocation2 + $0x490] sm:$0xff]
        %v1532 = vld [vmem:[#allocation2 + $0x498] sm:$0xff]
        %v1533 = vld [vmem:[#allocation2 + $0x4a0] sm:$0xff]
        %v1534 = vld [vmem:[#allocation2 + $0x4a8] sm:$0xff]
        %v1535 = vld [vmem:[#allocation2 + $0x4b0] sm:$0xff]
        %v1536 = vld [vmem:[#allocation2 + $0x4b8] sm:$0xff]
        %v1537 = vld [vmem:[#allocation2 + $0x4c0] sm:$0xff]
        %v1538 = vld [vmem:[#allocation2 + $0x4c8] sm:$0xff]
        %v1539 = vld [vmem:[#allocation2 + $0x4d0] sm:$0xff]
        %v1540 = vld [vmem:[#allocation2 + $0x4d8] sm:$0xff]
        %v1541 = vld [vmem:[#allocation2 + $0x4e0] sm:$0xff]
        %v1542 = vld [vmem:[#allocation2 + $0x4e8] sm:$0xff]
        %v1543 = vld [vmem:[#allocation2 + $0x4f0] sm:$0xff]
        %v1544 = vld [vmem:[#allocation2 + $0x4f8] sm:$0xff]
        %v1545 = vld [vmem:[#allocation2 + $0x500] sm:$0xff]
        %v1546 = vld [vmem:[#allocation2 + $0x508] sm:$0xff]
        %v1547 = vld [vmem:[#allocation2 + $0x510] sm:$0xff]
        %v1548 = vld [vmem:[#allocation2 + $0x518] sm:$0xff]
        %v1549 = vld [vmem:[#allocation2 + $0x520] sm:$0xff]
        %v1550 = vld [vmem:[#allocation2 + $0x528] sm:$0xff]
        %v1551 = vld [vmem:[#allocation2 + $0x530] sm:$0xff]
        %v1552 = vld [vmem:[#allocation2 + $0x538] sm:$0xff]
        %v1553 = vld [vmem:[#allocation2 + $0x540] sm:$0xff]
        %v1554 = vld [vmem:[#allocation2 + $0x548] sm:$0xff]
        %v1555 = vld [vmem:[#allocation2 + $0x550] sm:$0xff]
        %v1556 = vld [vmem:[#allocation2 + $0x558] sm:$0xff]
        %v1557 = vld [vmem:[#allocation2 + $0x560] sm:$0xff]
        %v1558 = vld [vmem:[#allocation2 + $0x568] sm:$0xff]
        %v1559 = vld [vmem:[#allocation2 + $0x570] sm:$0xff]
        %v1560 = vld [vmem:[#allocation2 + $0x578] sm:$0xff]
        %v1561 = vld [vmem:[#allocation2 + $0x580] sm:$0xff]
        %v1562 = vld [vmem:[#allocation2 + $0x588] sm:$0xff]
        %v1563 = vld [vmem:[#allocation2 + $0x590] sm:$0xff]
        %v1564 = vld [vmem:[#allocation2 + $0x598] sm:$0xff]
        %v1565 = vld [vmem:[#allocation2 + $0x5a0] sm:$0xff]
        %v1566 = vld [vmem:[#allocation2 + $0x5a8] sm:$0xff]
        %v1567 = vld [vmem:[#allocation2 + $0x5b0] sm:$0xff]
        %v1568 = vld [vmem:[#allocation2 + $0x5b8] sm:$0xff]
        %v1569 = vld [vmem:[#allocation2 + $0x5c0] sm:$0xff]
        %v1570 = vld [vmem:[#allocation2 + $0x5c8] sm:$0xff]
        %v1571 = vld [vmem:[#allocation2 + $0x5d0] sm:$0xff]
        %v1572 = vld [vmem:[#allocation2 + $0x5d8] sm:$0xff]
        %v1573 = vld [vmem:[#allocation2 + $0x5e0] sm:$0xff]
        %v1574 = vld [vmem:[#allocation2 + $0x5e8] sm:$0xff]
        %v1575 = vld [vmem:[#allocation2 + $0x5f0] sm:$0xff]
        %v1576 = vld [vmem:[#allocation2 + $0x5f8] sm:$0xff]
        %v1577 = vld [vmem:[#allocation2 + $0x600] sm:$0xff]
        %v1578 = vld [vmem:[#allocation2 + $0x608] sm:$0xff]
        %v1579 = vld [vmem:[#allocation2 + $0x610] sm:$0xff]
        %v1580 = vld [vmem:[#allocation2 + $0x618] sm:$0xff]
        %v1581 = vld [vmem:[#allocation2 + $0x620] sm:$0xff]
        %v1582 = vld [vmem:[#allocation2 + $0x628] sm:$0xff]
        %v1583 = vld [vmem:[#allocation2 + $0x630] sm:$0xff]
        %v1584 = vld [vmem:[#allocation2 + $0x638] sm:$0xff]
        %v1585 = vld [vmem:[#allocation2 + $0x640] sm:$0xff]
        %v1586 = vld [vmem:[#allocation2 + $0x648] sm:$0xff]
        %v1587 = vld [vmem:[#allocation2 + $0x650] sm:$0xff]
        %v1588 = vld [vmem:[#allocation2 + $0x658] sm:$0xff]
        %v1589 = vld [vmem:[#allocation2 + $0x660] sm:$0xff]
        %v1590 = vld [vmem:[#allocation2 + $0x668] sm:$0xff]
        %v1591 = vld [vmem:[#allocation2 + $0x670] sm:$0xff]
        %v1592 = vld [vmem:[#allocation2 + $0x678] sm:$0xff]
        %v1593 = vld [vmem:[#allocation2 + $0x680] sm:$0xff]
        %v1594 = vld [vmem:[#allocation2 + $0x688] sm:$0xff]
        %v1595 = vld [vmem:[#allocation2 + $0x690] sm:$0xff]
        %v1596 = vld [vmem:[#allocation2 + $0x698] sm:$0xff]
        %v1597 = vld [vmem:[#allocation2 + $0x6a0] sm:$0xff]
        %v1598 = vld [vmem:[#allocation2 + $0x6a8] sm:$0xff]
        %v1599 = vld [vmem:[#allocation2 + $0x6b0] sm:$0xff]
        %v1600 = vld [vmem:[#allocation2 + $0x6b8] sm:$0xff]
        %v1601 = vld [vmem:[#allocation2 + $0x6c0] sm:$0xff]
        %v1602 = vld [vmem:[#allocation2 + $0x6c8] sm:$0xff]
        %v1603 = vld [vmem:[#allocation2 + $0x6d0] sm:$0xff]
        %v1604 = vld [vmem:[#allocation2 + $0x6d8] sm:$0xff]
        %v1605 = vld [vmem:[#allocation2 + $0x6e0] sm:$0xff]
        %v1606 = vld [vmem:[#allocation2 + $0x6e8] sm:$0xff]
        %v1607 = vld [vmem:[#allocation2 + $0x6f0] sm:$0xff]
        %v1608 = vld [vmem:[#allocation2 + $0x6f8] sm:$0xff]
        %v1609 = vld [vmem:[#allocation2 + $0x700] sm:$0xff]
        %v1610 = vld [vmem:[#allocation2 + $0x708] sm:$0xff]
        %v1611 = vld [vmem:[#allocation2 + $0x710] sm:$0xff]
        %v1612 = vld [vmem:[#allocation2 + $0x718] sm:$0xff]
        %v1613 = vld [vmem:[#allocation2 + $0x720] sm:$0xff]
        %v1614 = vld [vmem:[#allocation2 + $0x728] sm:$0xff]
        %v1615 = vld [vmem:[#allocation2 + $0x730] sm:$0xff]
        %v1616 = vld [vmem:[#allocation2 + $0x738] sm:$0xff]
        %v1617 = vld [vmem:[#allocation2 + $0x740] sm:$0xff]
        %v1618 = vld [vmem:[#allocation2 + $0x748] sm:$0xff]
        %v1619 = vld [vmem:[#allocation2 + $0x750] sm:$0xff]
        %v1620 = vld [vmem:[#allocation2 + $0x758] sm:$0xff]
        %v1621 = vld [vmem:[#allocation2 + $0x760] sm:$0xff]
        %v1622 = vld [vmem:[#allocation2 + $0x768] sm:$0xff]
        %v1623 = vld [vmem:[#allocation2 + $0x770] sm:$0xff]
        %v1624 = vld [vmem:[#allocation2 + $0x778] sm:$0xff]
        %v1625 = vld [vmem:[#allocation2 + $0x780] sm:$0xff]
        %v1626 = vld [vmem:[#allocation2 + $0x788] sm:$0xff]
        %v1627 = vld [vmem:[#allocation2 + $0x790] sm:$0xff]
        %v1628 = vld [vmem:[#allocation2 + $0x798] sm:$0xff]
        %v1629 = vld [vmem:[#allocation2 + $0x7a0] sm:$0xff]
        %v1630 = vld [vmem:[#allocation2 + $0x7a8] sm:$0xff]
        %v1631 = vld [vmem:[#allocation2 + $0x7b0] sm:$0xff]
        %v1632 = vld [vmem:[#allocation2 + $0x7b8] sm:$0xff]
        %v1633 = vld [vmem:[#allocation2 + $0x7c0] sm:$0xff]
        %v1634 = vld [vmem:[#allocation2 + $0x7c8] sm:$0xff]
        %v1635 = vld [vmem:[#allocation2 + $0x7d0] sm:$0xff]
        %v1636 = vld [vmem:[#allocation2 + $0x7d8] sm:$0xff]
        %v1637 = vld [vmem:[#allocation2 + $0x7e0] sm:$0xff]
        %v1638 = vld [vmem:[#allocation2 + $0x7e8] sm:$0xff]
        %v1639 = vld [vmem:[#allocation2 + $0x7f0] sm:$0xff]
        %v1640 = vld [vmem:[#allocation2 + $0x7f8] sm:$0xff]
        %1641 = vmatprep.subr.mxu0 %v1506
        %1642 = vmatpush1.msra.mxu0 %v1505
        %1643 = vmatprep.subr.mxu0 %v1498
        %1644 = vmatpush1.msra.mxu0 %v1497
        %1645 = vmatprep.subr.mxu0 %v1490
        %1646 = vmatpush1.msra.mxu0 %v1489
        %1647 = vmatprep.subr.mxu0 %v1482
        %1648 = vmatpush1.msra.mxu0 %v1481
        %1649 = vmatprep.subr.mxu0 %v1474
        %1650 = vmatpush1.msra.mxu0 %v1473
        %1651 = vmatprep.subr.mxu0 %v1466
        %1652 = vmatpush1.msra.mxu0 %v1465
        %1653 = vmatprep.subr.mxu0 %v1458
        %1654 = vmatpush1.msra.mxu0 %v1457
        %1655 = vmatprep.subr.mxu0 %v1450
        %1656 = vmatpush1.msra.mxu0 %v1449
        %1657 = vmatprep.subr.mxu0 %v1442
        %1658 = vmatpush1.msra.mxu0 %v1441
        %1659 = vmatprep.subr.mxu0 %v1434
        %1660 = vmatpush1.msra.mxu0 %v1433
        %1661 = vmatprep.subr.mxu0 %v1426
        %1662 = vmatpush1.msra.mxu0 %v1425
        %1663 = vmatprep.subr.mxu0 %v1418
        %1664 = vmatpush1.msra.mxu0 %v1417
        %1665 = vmatprep.subr.mxu0 %v1410
        %1666 = vmatpush1.msra.mxu0 %v1409
        %1667 = vmatprep.subr.mxu0 %v1402
        %1668 = vmatpush1.msra.mxu0 %v1401
        %1669 = vmatprep.subr.mxu0 %v1394
        %1670 = vmatpush1.msra.mxu0 %v1393
        %1671 = vmatprep.subr.mxu0 %v1386
        %1672 = vmatpush1.msra.mxu0 %v1385
        %1673 = vmatprep.subr.mxu0 %v1634
        %1674 = vmatpush2.msra.mxu0 %v1633
        %1675 = vmatprep.subr.mxu0 %v1626
        %1676 = vmatpush2.msra.mxu0 %v1625
        %1677 = vmatprep.subr.mxu0 %v1618
        %1678 = vmatpush2.msra.mxu0 %v1617
        %1679 = vmatprep.subr.mxu0 %v1610
        %1680 = vmatpush2.msra.mxu0 %v1609
        %1681 = vmatprep.subr.mxu0 %v1602
        %1682 = vmatpush2.msra.mxu0 %v1601
        %1683 = vmatprep.subr.mxu0 %v1594
        %1684 = vmatpush2.msra.mxu0 %v1593
        %1685 = vmatprep.subr.mxu0 %v1586
        %1686 = vmatpush2.msra.mxu0 %v1585
        %1687 = vmatprep.subr.mxu0 %v1578
        %1688 = vmatpush2.msra.mxu0 %v1577
        %1689 = vmatprep.subr.mxu0 %v1570
        %1690 = vmatpush2.msra.mxu0 %v1569
        %1691 = vmatprep.subr.mxu0 %v1562
        %1692 = vmatpush2.msra.mxu0 %v1561
        %1693 = vmatprep.subr.mxu0 %v1554
        %1694 = vmatpush2.msra.mxu0 %v1553
        %1695 = vmatprep.subr.mxu0 %v1546
        %1696 = vmatpush2.msra.mxu0 %v1545
        %1697 = vmatprep.subr.mxu0 %v1538
        %1698 = vmatpush2.msra.mxu0 %v1537
        %1699 = vmatprep.subr.mxu0 %v1530
        %1700 = vmatpush2.msra.mxu0 %v1529
        %1701 = vmatprep.subr.mxu0 %v1522
        %1702 = vmatpush2.msra.mxu0 %v1521
        %1703 = vmatprep.subr.mxu0 %v1514
        %1704 = vmatpush2.msra.mxu0 %v1513
        %1705 = vmatprep.mubr.f32.mxu0 %v1384
        %1706 = vmatmul.mubr.f32.gmra.mxu0 %v1383
        %v1707 = vpop.f32.mrf.mxu0
        %v1708 = vadd.f32 0.0, %v1707
        %v1709 = vpop.f32.mrf.mxu0
        %v1710 = vadd.f32 0.0, %v1709
        %1711 = vdwg.mxu0
        %1712 = vmatprep.subr.mxu0 %v1508
        %1713 = vmatpush1.msra.mxu0 %v1507
        %1714 = vmatprep.subr.mxu0 %v1500
        %1715 = vmatpush1.msra.mxu0 %v1499
        %1716 = vmatprep.subr.mxu0 %v1492
        %1717 = vmatpush1.msra.mxu0 %v1491
        %1718 = vmatprep.subr.mxu0 %v1484
        %1719 = vmatpush1.msra.mxu0 %v1483
        %1720 = vmatprep.subr.mxu0 %v1476
        %1721 = vmatpush1.msra.mxu0 %v1475
        %1722 = vmatprep.subr.mxu0 %v1468
        %1723 = vmatpush1.msra.mxu0 %v1467
        %1724 = vmatprep.subr.mxu0 %v1460
        %1725 = vmatpush1.msra.mxu0 %v1459
        %1726 = vmatprep.subr.mxu0 %v1452
        %1727 = vmatpush1.msra.mxu0 %v1451
        %1728 = vmatprep.subr.mxu0 %v1444
        %1729 = vmatpush1.msra.mxu0 %v1443
        %1730 = vmatprep.subr.mxu0 %v1436
        %1731 = vmatpush1.msra.mxu0 %v1435
        %1732 = vmatprep.subr.mxu0 %v1428
        %1733 = vmatpush1.msra.mxu0 %v1427
        %1734 = vmatprep.subr.mxu0 %v1420
        %1735 = vmatpush1.msra.mxu0 %v1419
        %1736 = vmatprep.subr.mxu0 %v1412
        %1737 = vmatpush1.msra.mxu0 %v1411
        %1738 = vmatprep.subr.mxu0 %v1404
        %1739 = vmatpush1.msra.mxu0 %v1403
        %1740 = vmatprep.subr.mxu0 %v1396
        %1741 = vmatpush1.msra.mxu0 %v1395
        %1742 = vmatprep.subr.mxu0 %v1388
        %1743 = vmatpush1.msra.mxu0 %v1387
        %1744 = vmatprep.subr.mxu0 %v1636
        %1745 = vmatpush2.msra.mxu0 %v1635
        %1746 = vmatprep.subr.mxu0 %v1628
        %1747 = vmatpush2.msra.mxu0 %v1627
        %1748 = vmatprep.subr.mxu0 %v1620
        %1749 = vmatpush2.msra.mxu0 %v1619
        %1750 = vmatprep.subr.mxu0 %v1612
        %1751 = vmatpush2.msra.mxu0 %v1611
        %1752 = vmatprep.subr.mxu0 %v1604
        %1753 = vmatpush2.msra.mxu0 %v1603
        %1754 = vmatprep.subr.mxu0 %v1596
        %1755 = vmatpush2.msra.mxu0 %v1595
        %1756 = vmatprep.subr.mxu0 %v1588
        %1757 = vmatpush2.msra.mxu0 %v1587
        %1758 = vmatprep.subr.mxu0 %v1580
        %1759 = vmatpush2.msra.mxu0 %v1579
        %1760 = vmatprep.subr.mxu0 %v1572
        %1761 = vmatpush2.msra.mxu0 %v1571
        %1762 = vmatprep.subr.mxu0 %v1564
        %1763 = vmatpush2.msra.mxu0 %v1563
        %1764 = vmatprep.subr.mxu0 %v1556
        %1765 = vmatpush2.msra.mxu0 %v1555
        %1766 = vmatprep.subr.mxu0 %v1548
        %1767 = vmatpush2.msra.mxu0 %v1547
        %1768 = vmatprep.subr.mxu0 %v1540
        %1769 = vmatpush2.msra.mxu0 %v1539
        %1770 = vmatprep.subr.mxu0 %v1532
        %1771 = vmatpush2.msra.mxu0 %v1531
        %1772 = vmatprep.subr.mxu0 %v1524
        %1773 = vmatpush2.msra.mxu0 %v1523
        %1774 = vmatprep.subr.mxu0 %v1516
        %1775 = vmatpush2.msra.mxu0 %v1515
        %1776 = vmatprep.mubr.f32.mxu0 %v1384
        %1777 = vmatmul.mubr.f32.gmra.mxu0 %v1383
        %v1778 = vpop.f32.mrf.mxu0
        %v1779 = vadd.f32 0.0, %v1778
        %v1780 = vpop.f32.mrf.mxu0
        %v1781 = vadd.f32 0.0, %v1780
        %1782 = vdwg.mxu0
        %1783 = vmatprep.subr.mxu0 %v1510
        %1784 = vmatpush1.msra.mxu0 %v1509
        %1785 = vmatprep.subr.mxu0 %v1502
        %1786 = vmatpush1.msra.mxu0 %v1501
        %1787 = vmatprep.subr.mxu0 %v1494
        %1788 = vmatpush1.msra.mxu0 %v1493
        %1789 = vmatprep.subr.mxu0 %v1486
        %1790 = vmatpush1.msra.mxu0 %v1485
        %1791 = vmatprep.subr.mxu0 %v1478
        %1792 = vmatpush1.msra.mxu0 %v1477
        %1793 = vmatprep.subr.mxu0 %v1470
        %1794 = vmatpush1.msra.mxu0 %v1469
        %1795 = vmatprep.subr.mxu0 %v1462
        %1796 = vmatpush1.msra.mxu0 %v1461
        %1797 = vmatprep.subr.mxu0 %v1454
        %1798 = vmatpush1.msra.mxu0 %v1453
        %1799 = vmatprep.subr.mxu0 %v1446
        %1800 = vmatpush1.msra.mxu0 %v1445
        %1801 = vmatprep.subr.mxu0 %v1438
        %1802 = vmatpush1.msra.mxu0 %v1437
        %1803 = vmatprep.subr.mxu0 %v1430
        %1804 = vmatpush1.msra.mxu0 %v1429
        %1805 = vmatprep.subr.mxu0 %v1422
        %1806 = vmatpush1.msra.mxu0 %v1421
        %1807 = vmatprep.subr.mxu0 %v1414
        %1808 = vmatpush1.msra.mxu0 %v1413
        %1809 = vmatprep.subr.mxu0 %v1406
        %1810 = vmatpush1.msra.mxu0 %v1405
        %1811 = vmatprep.subr.mxu0 %v1398
        %1812 = vmatpush1.msra.mxu0 %v1397
        %1813 = vmatprep.subr.mxu0 %v1390
        %1814 = vmatpush1.msra.mxu0 %v1389
        %1815 = vmatprep.subr.mxu0 %v1638
        %1816 = vmatpush2.msra.mxu0 %v1637
        %1817 = vmatprep.subr.mxu0 %v1630
        %1818 = vmatpush2.msra.mxu0 %v1629
        %1819 = vmatprep.subr.mxu0 %v1622
        %1820 = vmatpush2.msra.mxu0 %v1621
        %1821 = vmatprep.subr.mxu0 %v1614
        %1822 = vmatpush2.msra.mxu0 %v1613
        %1823 = vmatprep.subr.mxu0 %v1606
        %1824 = vmatpush2.msra.mxu0 %v1605
        %1825 = vmatprep.subr.mxu0 %v1598
        %1826 = vmatpush2.msra.mxu0 %v1597
        %1827 = vmatprep.subr.mxu0 %v1590
        %1828 = vmatpush2.msra.mxu0 %v1589
        %1829 = vmatprep.subr.mxu0 %v1582
        %1830 = vmatpush2.msra.mxu0 %v1581
        %1831 = vmatprep.subr.mxu0 %v1574
        %1832 = vmatpush2.msra.mxu0 %v1573
        %1833 = vmatprep.subr.mxu0 %v1566
        %1834 = vmatpush2.msra.mxu0 %v1565
        %1835 = vmatprep.subr.mxu0 %v1558
        %1836 = vmatpush2.msra.mxu0 %v1557
        %1837 = vmatprep.subr.mxu0 %v1550
        %1838 = vmatpush2.msra.mxu0 %v1549
        %1839 = vmatprep.subr.mxu0 %v1542
        %1840 = vmatpush2.msra.mxu0 %v1541
        %1841 = vmatprep.subr.mxu0 %v1534
        %1842 = vmatpush2.msra.mxu0 %v1533
        %1843 = vmatprep.subr.mxu0 %v1526
        %1844 = vmatpush2.msra.mxu0 %v1525
        %1845 = vmatprep.subr.mxu0 %v1518
        %1846 = vmatpush2.msra.mxu0 %v1517
        %1847 = vmatprep.mubr.f32.mxu0 %v1384
        %1848 = vmatmul.mubr.f32.gmra.mxu0 %v1383
        %v1849 = vpop.f32.mrf.mxu0
        %v1850 = vadd.f32 0.0, %v1849
        %v1851 = vpop.f32.mrf.mxu0
        %v1852 = vadd.f32 0.0, %v1851
        %1853 = vdwg.mxu0
        %1854 = vmatprep.subr.mxu0 %v1512
        %1855 = vmatpush1.msra.mxu0 %v1511
        %1856 = vmatprep.subr.mxu0 %v1504
        %1857 = vmatpush1.msra.mxu0 %v1503
        %1858 = vmatprep.subr.mxu0 %v1496
        %1859 = vmatpush1.msra.mxu0 %v1495
        %1860 = vmatprep.subr.mxu0 %v1488
        %1861 = vmatpush1.msra.mxu0 %v1487
        %1862 = vmatprep.subr.mxu0 %v1480
        %1863 = vmatpush1.msra.mxu0 %v1479
        %1864 = vmatprep.subr.mxu0 %v1472
        %1865 = vmatpush1.msra.mxu0 %v1471
        %1866 = vmatprep.subr.mxu0 %v1464
        %1867 = vmatpush1.msra.mxu0 %v1463
        %1868 = vmatprep.subr.mxu0 %v1456
        %1869 = vmatpush1.msra.mxu0 %v1455
        %1870 = vmatprep.subr.mxu0 %v1448
        %1871 = vmatpush1.msra.mxu0 %v1447
        %1872 = vmatprep.subr.mxu0 %v1440
        %1873 = vmatpush1.msra.mxu0 %v1439
        %1874 = vmatprep.subr.mxu0 %v1432
        %1875 = vmatpush1.msra.mxu0 %v1431
        %1876 = vmatprep.subr.mxu0 %v1424
        %1877 = vmatpush1.msra.mxu0 %v1423
        %1878 = vmatprep.subr.mxu0 %v1416
        %1879 = vmatpush1.msra.mxu0 %v1415
        %1880 = vmatprep.subr.mxu0 %v1408
        %1881 = vmatpush1.msra.mxu0 %v1407
        %1882 = vmatprep.subr.mxu0 %v1400
        %1883 = vmatpush1.msra.mxu0 %v1399
        %1884 = vmatprep.subr.mxu0 %v1392
        %1885 = vmatpush1.msra.mxu0 %v1391
        %1886 = vmatprep.subr.mxu0 %v1640
        %1887 = vmatpush2.msra.mxu0 %v1639
        %1888 = vmatprep.subr.mxu0 %v1632
        %1889 = vmatpush2.msra.mxu0 %v1631
        %1890 = vmatprep.subr.mxu0 %v1624
        %1891 = vmatpush2.msra.mxu0 %v1623
        %1892 = vmatprep.subr.mxu0 %v1616
        %1893 = vmatpush2.msra.mxu0 %v1615
        %1894 = vmatprep.subr.mxu0 %v1608
        %1895 = vmatpush2.msra.mxu0 %v1607
        %1896 = vmatprep.subr.mxu0 %v1600
        %1897 = vmatpush2.msra.mxu0 %v1599
        %1898 = vmatprep.subr.mxu0 %v1592
        %1899 = vmatpush2.msra.mxu0 %v1591
        %1900 = vmatprep.subr.mxu0 %v1584
        %1901 = vmatpush2.msra.mxu0 %v1583
        %1902 = vmatprep.subr.mxu0 %v1576
        %1903 = vmatpush2.msra.mxu0 %v1575
        %1904 = vmatprep.subr.mxu0 %v1568
        %1905 = vmatpush2.msra.mxu0 %v1567
        %1906 = vmatprep.subr.mxu0 %v1560
        %1907 = vmatpush2.msra.mxu0 %v1559
        %1908 = vmatprep.subr.mxu0 %v1552
        %1909 = vmatpush2.msra.mxu0 %v1551
        %1910 = vmatprep.subr.mxu0 %v1544
        %1911 = vmatpush2.msra.mxu0 %v1543
        %1912 = vmatprep.subr.mxu0 %v1536
        %1913 = vmatpush2.msra.mxu0 %v1535
        %1914 = vmatprep.subr.mxu0 %v1528
        %1915 = vmatpush2.msra.mxu0 %v1527
        %1916 = vmatprep.subr.mxu0 %v1520
        %1917 = vmatpush2.msra.mxu0 %v1519
        %1918 = vmatprep.mubr.f32.mxu0 %v1384
        %1919 = vmatmul.mubr.f32.gmra.mxu0 %v1383
        %v1920 = vpop.f32.mrf.mxu0
        %v1921 = vadd.f32 0.0, %v1920
        %v1922 = vpop.f32.mrf.mxu0
        %v1923 = vadd.f32 0.0, %v1922
        %1924 = vdwg.mxu0
        %1925 = vst [vmem:[%s583] sm:$0xff] %v1708
        %1926 = vst [vmem:[%s583 + $0x8] sm:$0xff] %v1710
        %1927 = vst [vmem:[%s583 + $0x10] sm:$0xff] %v1779
        %1928 = vst [vmem:[%s583 + $0x18] sm:$0xff] %v1781
        %1929 = vst [vmem:[%s583 + $0x20] sm:$0xff] %v1850
        %1930 = vst [vmem:[%s583 + $0x28] sm:$0xff] %v1852
        %1931 = vst [vmem:[%s583 + $0x30] sm:$0xff] %v1921
        %1932 = vst [vmem:[%s583 + $0x38] sm:$0xff] %v1923
        %s1933 = sand.u32 %s424, 1
        %s1934 = scalar_lea.sflag [#allocation4], %s1933
        %s1935 = sand.u32 %s424, 1
        %s1936 = smul.addr %s1935, 64
        %s1937 = scalar_lea.vmem [#allocation5], %s1936
        // Predicated region
        $region97: #{tpu_custom_call.1} parent=91 // pred_check
          %p1938 = pneg %p434
        $region98: #{tpu_custom_call.1} parent=91 // pred_check_branch
          %1940 = sbr.rel (%p1938) target = $region100
        $region99: #{tpu_custom_call.1} parent=91 // pred_region
          %s1942 = ssub.s32 1024, 1024
          %1943 = vsyncadd %s1934, %s1942
          %s1944 = smul.addr %s33, 8
          %s1945 = smul.addr %s1944, 128
          %s1946 = scalar_lea.hbm %s18, %s1945
          %s1948 = sshll.u32 %s1937, 4
          %s1949 = int_to_ptr.vmem [resolvable:$true] %s1948
          %1951 = dma.vmem_to_hbm [thread:$0]  %s1949, 1024, %s1946, %s1934
        $region100: #{tpu_custom_call.1} parent=91 // pred_fallthru
          _
      $region92: #{tpu_custom_call.1} parent=5 // pred_fallthru
        _
      %p1952 = scmp.le.s32.totalorder 2, %s28
      // Predicated region
      $region101: #{tpu_custom_call.1} parent=5 // pred_check
        %p1953 = pneg %p1952
      $region102: #{tpu_custom_call.1} parent=5 // pred_check_branch
        %1955 = sbr.rel (%p1953) target = $region104
      $region103: #{tpu_custom_call.1} parent=5 // pred_region
        %s1956 = ssub.s32 %s28, 2
        // Predicated region
        $region105: #{tpu_custom_call.1} parent=103 // pred_check
          %p1957 = pneg %p440
        $region106: #{tpu_custom_call.1} parent=103 // pred_check_branch
          %1959 = sbr.rel (%p1957) target = $region108
        $region107: #{tpu_custom_call.1} parent=103 // pred_region
          %s1960 = sand.u32 %s425, 1
          %s1961 = scalar_lea.sflag [#allocation4], %s1960
          %s1962 = sand.u32 %s425, 1
          %s1963 = smul.addr %s1962, 64
          %s1964 = scalar_lea.vmem [#allocation5], %s1963
          %1965 = dma.done %s1961, 1024
        $region108: #{tpu_custom_call.1} parent=103 // pred_fallthru
          _
      $region104: #{tpu_custom_call.1} parent=5 // pred_fallthru
        _
    $region6: #{tpu_custom_call.1} parent=1 // loop_footer
      %s32 = sadd.s32 1, %s28
    $region7: #{tpu_custom_call.1} parent=1 // loop_footer_branch
      %27 = sbr.rel target = $region3
    $region8: #{tpu_custom_call.1} parent=1 // loop_exit
      _
    %1966 = vsyncpa [#allocation3], 1
    %s1967 = scalar_lea.sflag [#allocation3], 1
    %1968 = vsyncpa %s1967, 1
    %1969 = vsyncpa [#allocation4], 1
    %s1970 = scalar_lea.sflag [#allocation4], 1
    %1971 = vsyncpa %s1970, 1

</llo_original>
